<compile_context>
chip_gen: v5e
topology: v5e:2x2
jax: 0.10.0
libtpu: 0.0.40
codegen_flags: <defaults>
</compile_context>

<pallas_src>
import jax
import jax.numpy as jnp
import numpy as np
from jax.experimental import pallas as pl
from jax.experimental.pallas import tpu as pltpu


def _round_up(x, m):
    return ((x + m - 1) // m) * m


def breadth_gat_kernel(xq_ref, xk_ref, w_ref, att_src_ref, att_dst_ref,
                       bias_ref, mask_ref, o_ref,
                       hq_ref, m_ref, l_ref, acc_ref):
    ki = pl.program_id(1)

    @pl.when(ki == 0)
    def _init():
        # h for this block of target rows: computed once, resident over the ki sweep.
        hq_ref[...] = jnp.dot(xq_ref[...], w_ref[...],
                              preferred_element_type=jnp.float32)
        m_ref[...] = jnp.full(m_ref.shape, -jnp.inf, jnp.float32)
        l_ref[...] = jnp.zeros(l_ref.shape, jnp.float32)
        acc_ref[...] = jnp.zeros(acc_ref.shape, jnp.float32)

    hq = hq_ref[...]                                            # (TQ, F) f32
    hk = jnp.dot(xk_ref[...], w_ref[...],
                 preferred_element_type=jnp.float32)            # (TK, F) f32

    # GAT attention logits (heads=1):
    #   a_dst[i] = <h_q[i], att_dst>,   a_src[j] = <h_k[j], att_src>
    a_dst = jnp.dot(hq, att_dst_ref[...],
                    preferred_element_type=jnp.float32)         # (TQ, 1)
    a_src = jnp.dot(att_src_ref[...], hk.T,                     # per-tile transpose
                    preferred_element_type=jnp.float32)         # (1, TK)

    # e[i, j] = leaky_relu(a_dst[i] + a_src[j], 0.2) + additive edge mask
    e = a_dst + a_src                                           # (TQ, TK)
    e = jnp.where(e >= 0.0, e, 0.2 * e)
    e = e + mask_ref[...].astype(jnp.float32)                   # 0 / -1e30 (bf16)

    # Online-softmax update over source tiles.
    m_prev = m_ref[...]
    m_new = jnp.maximum(m_prev, jnp.max(e, axis=-1, keepdims=True))
    alpha = jnp.exp(m_prev - m_new)
    p = jnp.exp(e - m_new)
    l_ref[...] = alpha * l_ref[...] + jnp.sum(p, axis=-1, keepdims=True)
    acc_ref[...] = alpha * acc_ref[...] + jnp.dot(
        p.astype(jnp.bfloat16), hk.astype(jnp.bfloat16),
        preferred_element_type=jnp.float32)
    m_ref[...] = m_new

    @pl.when(ki == pl.num_programs(1) - 1)
    def _finish():
        inv_l = pl.reciprocal(l_ref[...], approx=True)
        o_ref[...] = jnp.tanh(acc_ref[...] * inv_l + bias_ref[...])


def breadth_forward(x, w, att_src, att_dst, bias, edge_index,
                    *, tile_q=128, tile_k=128):
    n, f_in = x.shape
    f_out = w.shape[1]

    n_pad = _round_up(n, max(tile_q, tile_k))
    f_in_pad = _round_up(f_in, 128)
    f_out_pad = _round_up(f_out, 128)

    # Pad features to 128 lanes (MXU fill + lane-dense stores); cast the big
    # matmul operands to bf16 (accumulation stays f32 inside the kernel).
    x_p = jnp.zeros((n_pad, f_in_pad), jnp.float32).at[:n, :f_in].set(x)
    x_p = x_p.astype(jnp.bfloat16)
    w_p = jnp.zeros((f_in_pad, f_out_pad), jnp.float32).at[:f_in, :f_out].set(w)
    w_p = w_p.astype(jnp.bfloat16)
    att_src_p = jnp.zeros((1, f_out_pad), jnp.float32).at[:, :f_out].set(att_src)
    att_dst_p = jnp.zeros((f_out_pad, 1), jnp.float32).at[:f_out, :].set(att_dst)
    bias_p = jnp.zeros((1, f_out_pad), jnp.float32).at[:, :f_out].set(bias)

    # Additive adjacency mask in bf16: 0 where edge j->i or i==j (self loops),
    # -1e30 elsewhere (including padded rows/columns).
    mask = jnp.full((n_pad, n_pad), -1e30, jnp.float32)
    mask = mask.at[edge_index[1], edge_index[0]].set(0.0)
    diag = jnp.arange(n)
    mask = mask.at[diag, diag].set(0.0)
    mask = mask.astype(jnp.bfloat16)

    grid = (n_pad // tile_q, n_pad // tile_k)

    flops = (2 * n_pad * n_pad * f_out_pad                        # probs @ h
             + 2 * (grid[0] + 1) * n_pad * f_in_pad * f_out_pad   # x @ W (hq + hk per q-tile)
             + 4 * n_pad * n_pad)                                  # logits / softmax VPU work
    cost = pl.CostEstimate(
        flops=int(flops),
        transcendentals=int(n_pad * n_pad),
        bytes_accessed=int(mask.size * 2
                           + x_p.size * 2 * (grid[0] + 1)
                           + w_p.size * 2
                           + n_pad * f_out_pad * 4))

    out = pl.pallas_call(
        breadth_gat_kernel,
        out_shape=jax.ShapeDtypeStruct((n_pad, f_out_pad), jnp.float32),
        grid_spec=pltpu.PrefetchScalarGridSpec(
            num_scalar_prefetch=0,
            grid=grid,
            in_specs=[
                pl.BlockSpec((tile_q, f_in_pad), lambda qi, ki: (qi, 0)),    # x (target rows)
                pl.BlockSpec((tile_k, f_in_pad), lambda qi, ki: (ki, 0)),    # x (source rows)
                pl.BlockSpec((f_in_pad, f_out_pad), lambda qi, ki: (0, 0)),  # W (resident)
                pl.BlockSpec((1, f_out_pad), lambda qi, ki: (0, 0)),         # att_src (resident)
                pl.BlockSpec((f_out_pad, 1), lambda qi, ki: (0, 0)),         # att_dst (resident)
                pl.BlockSpec((1, f_out_pad), lambda qi, ki: (0, 0)),         # bias (resident)
                pl.BlockSpec((tile_q, tile_k), lambda qi, ki: (qi, ki)),     # additive mask
            ],
            out_specs=pl.BlockSpec((tile_q, f_out_pad), lambda qi, ki: (qi, 0)),
            scratch_shapes=[
                pltpu.VMEM((tile_q, f_out_pad), jnp.float32),   # h_q (resident per q-tile)
                pltpu.VMEM((tile_q, 1), jnp.float32),           # running max
                pltpu.VMEM((tile_q, 1), jnp.float32),           # running sum
                pltpu.VMEM((tile_q, f_out_pad), jnp.float32),   # accumulator
            ]),
        compiler_params=pltpu.CompilerParams(
            dimension_semantics=("parallel", "arbitrary")),
        cost_estimate=cost,
    )(x_p, x_p, w_p, att_src_p, att_dst_p, bias_p, mask)

    return out[:n, :f_out]


def breadth_reference(x, w, att_src, att_dst, bias, edge_index):
    """Pure-JAX reference: GATConv(heads=1, add_self_loops=True) + tanh."""
    n = x.shape[0]
    adj = jnp.zeros((n, n), jnp.float32).at[edge_index[1], edge_index[0]].set(1.0)
    adj = jnp.maximum(adj, jnp.eye(n, dtype=jnp.float32))
    h = jnp.dot(x.astype(jnp.bfloat16), w.astype(jnp.bfloat16),
                preferred_element_type=jnp.float32)
    a_dst = h @ att_dst                       # (N, 1)
    a_src = (h @ att_src.T).T                 # (1, N)
    e = a_dst + a_src
    e = jnp.where(e >= 0.0, e, 0.2 * e)
    e = jnp.where(adj > 0.0, e, -1e30)
    attn = jax.nn.softmax(e, axis=-1)
    out = jnp.dot(attn.astype(jnp.bfloat16), h.astype(jnp.bfloat16),
                  preferred_element_type=jnp.float32) + bias
    return jnp.tanh(out)


if __name__ == "__main__":
    N, IN_DIM, OUT_DIM, E = 200, 48, 48, 800

    key = jax.random.PRNGKey(0)
    k_x, k_w, k_as, k_ad, k_b, k_src, k_dst = jax.random.split(key, 7)

    # Node features + deterministic random graph (PyG edge_index convention).
    x = jax.random.normal(k_x, (N, IN_DIM), jnp.float32)
    edge_src = jax.random.randint(k_src, (E,), 0, N)
    edge_dst = jax.random.randint(k_dst, (E,), 0, N)
    edge_index = jnp.stack([edge_src, edge_dst])      # (2, E)

    # Deterministic GATConv(heads=1) parameters (synthetic init, no checkpoint).
    w = 0.3 * jax.random.normal(k_w, (IN_DIM, OUT_DIM), jnp.float32)
    att_src = 0.3 * jax.random.normal(k_as, (1, OUT_DIM), jnp.float32)
    att_dst = 0.3 * jax.random.normal(k_ad, (OUT_DIM, 1), jnp.float32)
    bias = 0.1 * jax.random.normal(k_b, (1, OUT_DIM), jnp.float32)

    out = breadth_forward(x, w, att_src, att_dst, bias, edge_index)
    out = jax.block_until_ready(out)

    ref = breadth_reference(x, w, att_src, att_dst, bias, edge_index)
    # bf16 MXU operands (per perf review) -> relaxed tolerance vs the f32-softmax
    # reference; genuine bugs (masking / softmax / tiling) would be O(0.1..1).
    np.testing.assert_allclose(np.asarray(out), np.asarray(ref),
                               rtol=3e-2, atol=3e-2)
    print("KERNEL_OK")
</pallas_src>

<mosaic_0001>
module attributes {stable_mosaic.version = 11 : i64} {
  func.func @breadth_gat_kernel(%arg0: i32, %arg1: i32, %arg2: memref<128x128xbf16, #tpu.memory_space<vmem>>, %arg3: memref<128x128xbf16, #tpu.memory_space<vmem>>, %arg4: memref<128x128xbf16, #tpu.memory_space<vmem>>, %arg5: memref<1x128xf32, #tpu.memory_space<vmem>>, %arg6: memref<128x1xf32, #tpu.memory_space<vmem>>, %arg7: memref<1x128xf32, #tpu.memory_space<vmem>>, %arg8: memref<128x128xbf16, #tpu.memory_space<vmem>>, %arg9: memref<128x128xf32, #tpu.memory_space<vmem>>, %arg10: memref<128x128xf32, #tpu.memory_space<vmem>>, %arg11: memref<128x1xf32, #tpu.memory_space<vmem>>, %arg12: memref<128x1xf32, #tpu.memory_space<vmem>>, %arg13: memref<128x128xf32, #tpu.memory_space<vmem>>) attributes {dimension_semantics = [#tpu.dimension_semantics<parallel>, #tpu.dimension_semantics<arbitrary>], iteration_bounds = array<i64: 2, 2>, scalar_prefetch = 0 : i64, scratch_operands = 4 : i64, tpu.core_type = #tpu.core_type<tc>, window_params = [{transform_indices = @transform_0, window_bounds = array<i64: 128, 128>}, {transform_indices = @transform_1, window_bounds = array<i64: 128, 128>}, {pipeline_mode = #tpu.pipeline_mode<synchronous>, transform_indices = @transform_2, window_bounds = array<i64: 128, 128>}, {pipeline_mode = #tpu.pipeline_mode<synchronous>, transform_indices = @transform_3, window_bounds = array<i64: 1, 128>}, {pipeline_mode = #tpu.pipeline_mode<synchronous>, transform_indices = @transform_4, window_bounds = array<i64: 128, 1>}, {pipeline_mode = #tpu.pipeline_mode<synchronous>, transform_indices = @transform_5, window_bounds = array<i64: 1, 128>}, {transform_indices = @transform_6, window_bounds = array<i64: 128, 128>}, {transform_indices = @transform_7, window_bounds = array<i64: 128, 128>}]} {
    %c0_i32 = arith.constant 0 : i32
    %0 = arith.cmpi eq, %arg1, %c0_i32 : i32
    %1 = arith.extui %0 : i1 to i32
    %c0_i32_0 = arith.constant 0 : i32
    %2 = arith.cmpi ne, %1, %c0_i32_0 : i32
    scf.if %2 {
      %c0_32 = arith.constant 0 : index
      %c0_33 = arith.constant 0 : index
      %50 = vector.load %arg2[%c0_32, %c0_33] : memref<128x128xbf16, #tpu.memory_space<vmem>>, vector<128x128xbf16>
      %c0_34 = arith.constant 0 : index
      %c0_35 = arith.constant 0 : index
      %51 = vector.load %arg4[%c0_34, %c0_35] : memref<128x128xbf16, #tpu.memory_space<vmem>>, vector<128x128xbf16>
      %cst_36 = arith.constant dense<0.000000e+00> : vector<128x128xf32>
      %52 = tpu.matmul %50, %51, %cst_36 {dimension_numbers = #tpu.dot_dimension_numbers<[1], [0], [0], [1], [0, 0, 1, 1], [], []>} : vector<128x128xbf16>, vector<128x128xbf16>, vector<128x128xf32> -> vector<128x128xf32>
      %c0_37 = arith.constant 0 : index
      %c0_38 = arith.constant 0 : index
      %53 = vector.load %arg10[%c0_37, %c0_38] : memref<128x128xf32, #tpu.memory_space<vmem>>, vector<128x128xf32>
      tpu.vector_store %arg10[%c0_37, %c0_38], %52 {strides = array<i32>} : memref<128x128xf32, #tpu.memory_space<vmem>>, vector<128x128xf32>,
      %cst_39 = arith.constant 0xFF800000 : f32
      %54 = vector.broadcast %cst_39 : f32 to vector<128x1xf32>
      %c0_40 = arith.constant 0 : index
      %c0_41 = arith.constant 0 : index
      %55 = vector.load %arg11[%c0_40, %c0_41] : memref<128x1xf32, #tpu.memory_space<vmem>>, vector<128x1xf32>
      tpu.vector_store %arg11[%c0_40, %c0_41], %54 {strides = array<i32>} : memref<128x1xf32, #tpu.memory_space<vmem>>, vector<128x1xf32>,
      %cst_42 = arith.constant 0.000000e+00 : f32
      %56 = vector.broadcast %cst_42 : f32 to vector<128x1xf32>
      %c0_43 = arith.constant 0 : index
      %c0_44 = arith.constant 0 : index
      %57 = vector.load %arg12[%c0_43, %c0_44] : memref<128x1xf32, #tpu.memory_space<vmem>>, vector<128x1xf32>
      tpu.vector_store %arg12[%c0_43, %c0_44], %56 {strides = array<i32>} : memref<128x1xf32, #tpu.memory_space<vmem>>, vector<128x1xf32>,
      %cst_45 = arith.constant 0.000000e+00 : f32
      %58 = vector.broadcast %cst_45 : f32 to vector<128x128xf32>
      %c0_46 = arith.constant 0 : index
      %c0_47 = arith.constant 0 : index
      %59 = vector.load %arg13[%c0_46, %c0_47] : memref<128x128xf32, #tpu.memory_space<vmem>>, vector<128x128xf32>
      tpu.vector_store %arg13[%c0_46, %c0_47], %58 {strides = array<i32>} : memref<128x128xf32, #tpu.memory_space<vmem>>, vector<128x128xf32>,
    } else {
    }
    %c0 = arith.constant 0 : index
    %c0_1 = arith.constant 0 : index
    %3 = vector.load %arg10[%c0, %c0_1] : memref<128x128xf32, #tpu.memory_space<vmem>>, vector<128x128xf32>
    %c0_2 = arith.constant 0 : index
    %c0_3 = arith.constant 0 : index
    %4 = vector.load %arg3[%c0_2, %c0_3] : memref<128x128xbf16, #tpu.memory_space<vmem>>, vector<128x128xbf16>
    %c0_4 = arith.constant 0 : index
    %c0_5 = arith.constant 0 : index
    %5 = vector.load %arg4[%c0_4, %c0_5] : memref<128x128xbf16, #tpu.memory_space<vmem>>, vector<128x128xbf16>
    %cst = arith.constant dense<0.000000e+00> : vector<128x128xf32>
    %6 = tpu.matmul %4, %5, %cst {dimension_numbers = #tpu.dot_dimension_numbers<[1], [0], [0], [1], [0, 0, 1, 1], [], []>} : vector<128x128xbf16>, vector<128x128xbf16>, vector<128x128xf32> -> vector<128x128xf32>
    %c0_6 = arith.constant 0 : index
    %c0_7 = arith.constant 0 : index
    %7 = vector.load %arg6[%c0_6, %c0_7] : memref<128x1xf32, #tpu.memory_space<vmem>>, vector<128x1xf32>
    %cst_8 = arith.constant dense<0.000000e+00> : vector<128x1xf32>
    %8 = tpu.matmul %3, %7, %cst_8 {dimension_numbers = #tpu.dot_dimension_numbers<[1], [0], [0], [1], [0, 0, 1, 1], [], []>} : vector<128x128xf32>, vector<128x1xf32>, vector<128x1xf32> -> vector<128x1xf32>
    %c0_9 = arith.constant 0 : index
    %c0_10 = arith.constant 0 : index
    %9 = vector.load %arg5[%c0_9, %c0_10] : memref<1x128xf32, #tpu.memory_space<vmem>>, vector<1x128xf32>
    %10 = tpu.transpose %6, [1, 0] : vector<128x128xf32> -> vector<128x128xf32>
    %cst_11 = arith.constant dense<0.000000e+00> : vector<1x128xf32>
    %11 = tpu.matmul %9, %10, %cst_11 {dimension_numbers = #tpu.dot_dimension_numbers<[1], [0], [0], [1], [0, 0, 1, 1], [], []>} : vector<1x128xf32>, vector<128x128xf32>, vector<1x128xf32> -> vector<1x128xf32>
    %12 = vector.broadcast %8 : vector<128x1xf32> to vector<128x128xf32>
    %13 = vector.broadcast %11 : vector<1x128xf32> to vector<128x128xf32>
    %14 = arith.addf %12, %13 : vector<128x128xf32>
    %cst_12 = arith.constant 0.000000e+00 : f32
    %15 = vector.broadcast %cst_12 : f32 to vector<128x128xf32>
    %16 = arith.cmpf oge, %14, %15 : vector<128x128xf32>
    %cst_13 = arith.constant 2.000000e-01 : f32
    %17 = vector.broadcast %cst_13 : f32 to vector<128x128xf32>
    %18 = arith.mulf %17, %14 : vector<128x128xf32>
    %19 = arith.select %16, %14, %18 : vector<128x128xi1>, vector<128x128xf32>
    %c0_14 = arith.constant 0 : index
    %c0_15 = arith.constant 0 : index
    %20 = vector.load %arg8[%c0_14, %c0_15] : memref<128x128xbf16, #tpu.memory_space<vmem>>, vector<128x128xbf16>
    %21 = arith.extf %20 : vector<128x128xbf16> to vector<128x128xf32>
    %22 = arith.addf %19, %21 : vector<128x128xf32>
    %c0_16 = arith.constant 0 : index
    %c0_17 = arith.constant 0 : index
    %23 = vector.load %arg11[%c0_16, %c0_17] : memref<128x1xf32, #tpu.memory_space<vmem>>, vector<128x1xf32>
    %cst_18 = arith.constant dense<0xFF800000> : vector<128xf32>
    %24 = vector.multi_reduction <maximumf>, %22, %cst_18 [1] : vector<128x128xf32> to vector<128xf32>
    %25 = vector.shape_cast %24 : vector<128xf32> to vector<128x1xf32>
    %26 = arith.maximumf %23, %25 : vector<128x1xf32>
    %27 = arith.subf %23, %26 : vector<128x1xf32>
    %28 = math.exp %27 : vector<128x1xf32>
    %29 = vector.broadcast %26 : vector<128x1xf32> to vector<128x128xf32>
    %30 = arith.subf %22, %29 : vector<128x128xf32>
    %31 = math.exp %30 : vector<128x128xf32>
    %c0_19 = arith.constant 0 : index
    %c0_20 = arith.constant 0 : index
    %32 = vector.load %arg12[%c0_19, %c0_20] : memref<128x1xf32, #tpu.memory_space<vmem>>, vector<128x1xf32>
    %33 = arith.mulf %28, %32 : vector<128x1xf32>
    %cst_21 = arith.constant dense<0.000000e+00> : vector<128xf32>
    %34 = vector.multi_reduction <add>, %31, %cst_21 [1] : vector<128x128xf32> to vector<128xf32>
    %35 = vector.shape_cast %34 : vector<128xf32> to vector<128x1xf32>
    %36 = arith.addf %33, %35 : vector<128x1xf32>
    %c0_22 = arith.constant 0 : index
    %c0_23 = arith.constant 0 : index
    %37 = vector.load %arg12[%c0_22, %c0_23] : memref<128x1xf32, #tpu.memory_space<vmem>>, vector<128x1xf32>
    tpu.vector_store %arg12[%c0_22, %c0_23], %36 {strides = array<i32>} : memref<128x1xf32, #tpu.memory_space<vmem>>, vector<128x1xf32>,
    %c0_24 = arith.constant 0 : index
    %c0_25 = arith.constant 0 : index
    %38 = vector.load %arg13[%c0_24, %c0_25] : memref<128x128xf32, #tpu.memory_space<vmem>>, vector<128x128xf32>
    %39 = vector.broadcast %28 : vector<128x1xf32> to vector<128x128xf32>
    %40 = arith.mulf %39, %38 : vector<128x128xf32>
    %41 = arith.truncf %31 : vector<128x128xf32> to vector<128x128xbf16>
    %42 = arith.truncf %6 : vector<128x128xf32> to vector<128x128xbf16>
    %cst_26 = arith.constant dense<0.000000e+00> : vector<128x128xf32>
    %43 = tpu.matmul %41, %42, %cst_26 {dimension_numbers = #tpu.dot_dimension_numbers<[1], [0], [0], [1], [0, 0, 1, 1], [], []>} : vector<128x128xbf16>, vector<128x128xbf16>, vector<128x128xf32> -> vector<128x128xf32>
    %44 = arith.addf %40, %43 : vector<128x128xf32>
    %c0_27 = arith.constant 0 : index
    %c0_28 = arith.constant 0 : index
    %45 = vector.load %arg13[%c0_27, %c0_28] : memref<128x128xf32, #tpu.memory_space<vmem>>, vector<128x128xf32>
    tpu.vector_store %arg13[%c0_27, %c0_28], %44 {strides = array<i32>} : memref<128x128xf32, #tpu.memory_space<vmem>>, vector<128x128xf32>,
    %c0_29 = arith.constant 0 : index
    %c0_30 = arith.constant 0 : index
    %46 = vector.load %arg11[%c0_29, %c0_30] : memref<128x1xf32, #tpu.memory_space<vmem>>, vector<128x1xf32>
    tpu.vector_store %arg11[%c0_29, %c0_30], %26 {strides = array<i32>} : memref<128x1xf32, #tpu.memory_space<vmem>>, vector<128x1xf32>,
    %c1_i32 = arith.constant 1 : i32
    %47 = arith.cmpi eq, %arg1, %c1_i32 : i32
    %48 = arith.extui %47 : i1 to i32
    %c0_i32_31 = arith.constant 0 : i32
    %49 = arith.cmpi ne, %48, %c0_i32_31 : i32
    scf.if %49 {
      %c0_32 = arith.constant 0 : index
      %c0_33 = arith.constant 0 : index
      %50 = vector.load %arg12[%c0_32, %c0_33] : memref<128x1xf32, #tpu.memory_space<vmem>>, vector<128x1xf32>
      %51 = tpu.reciprocal %50 {approx = true} : vector<128x1xf32> -> vector<128x1xf32>
      %c0_34 = arith.constant 0 : index
      %c0_35 = arith.constant 0 : index
      %52 = vector.load %arg13[%c0_34, %c0_35] : memref<128x128xf32, #tpu.memory_space<vmem>>, vector<128x128xf32>
      %53 = vector.broadcast %51 : vector<128x1xf32> to vector<128x128xf32>
      %54 = arith.mulf %52, %53 : vector<128x128xf32>
      %c0_36 = arith.constant 0 : index
      %c0_37 = arith.constant 0 : index
      %55 = vector.load %arg7[%c0_36, %c0_37] : memref<1x128xf32, #tpu.memory_space<vmem>>, vector<1x128xf32>
      %56 = vector.broadcast %55 : vector<1x128xf32> to vector<128x128xf32>
      %57 = arith.addf %54, %56 : vector<128x128xf32>
      %58 = math.tanh %57 : vector<128x128xf32>
      %c0_38 = arith.constant 0 : index
      %c0_39 = arith.constant 0 : index
      %59 = vector.load %arg9[%c0_38, %c0_39] : memref<128x128xf32, #tpu.memory_space<vmem>>, vector<128x128xf32>
      tpu.vector_store %arg9[%c0_38, %c0_39], %58 {strides = array<i32>} : memref<128x128xf32, #tpu.memory_space<vmem>>, vector<128x128xf32>,
    } else {
    }
    return
  }
  func.func @transform_0(%arg0: i32, %arg1: i32) -> (i32, i32) {
    %c0_i32 = arith.constant 0 : i32
    %c0_i32_0 = arith.constant 0 : i32
    return %arg0, %c0_i32 : i32, i32
  }
  func.func @transform_1(%arg0: i32, %arg1: i32) -> (i32, i32) {
    %c0_i32 = arith.constant 0 : i32
    %c0_i32_0 = arith.constant 0 : i32
    return %arg1, %c0_i32 : i32, i32
  }
  func.func @transform_2(%arg0: i32, %arg1: i32) -> (i32, i32) {
    %c0_i32 = arith.constant 0 : i32
    %c0_i32_0 = arith.constant 0 : i32
    %c0_i32_1 = arith.constant 0 : i32
    return %c0_i32, %c0_i32_0 : i32, i32
  }
  func.func @transform_3(%arg0: i32, %arg1: i32) -> (i32, i32) {
    %c0_i32 = arith.constant 0 : i32
    %c0_i32_0 = arith.constant 0 : i32
    %c0_i32_1 = arith.constant 0 : i32
    return %c0_i32, %c0_i32_0 : i32, i32
  }
  func.func @transform_4(%arg0: i32, %arg1: i32) -> (i32, i32) {
    %c0_i32 = arith.constant 0 : i32
    %c0_i32_0 = arith.constant 0 : i32
    %c0_i32_1 = arith.constant 0 : i32
    return %c0_i32, %c0_i32_0 : i32, i32
  }
  func.func @transform_5(%arg0: i32, %arg1: i32) -> (i32, i32) {
    %c0_i32 = arith.constant 0 : i32
    %c0_i32_0 = arith.constant 0 : i32
    %c0_i32_1 = arith.constant 0 : i32
    return %c0_i32, %c0_i32_0 : i32, i32
  }
  func.func @transform_6(%arg0: i32, %arg1: i32) -> (i32, i32) {
    %c0_i32 = arith.constant 0 : i32
    return %arg0, %arg1 : i32, i32
  }
  func.func @transform_7(%arg0: i32, %arg1: i32) -> (i32, i32) {
    %c0_i32 = arith.constant 0 : i32
    %c0_i32_0 = arith.constant 0 : i32
    return %arg0, %c0_i32 : i32, i32
  }
}

</mosaic_0001>

<llo_original>
// kernel: tpu_custom_call.1
$region0: #{tpu_custom_call.1}
  #allocation0 [shape = 'u32[]', space=smem, size = 0x4, offset = 0x4, fixed_abs, tag = 'smem constant byte address 0x4 - core index']
  #allocation1 [shape = 'u32[72,128]{1,0:T(1,128)}', space=vmem, size = 0x9000, scoped, tag = 'internal scratch']
  #allocation2 [shape = 'f32[128,128]{1,0:T(8,128)}', space=vmem, size = 0x10000, scoped, tag = 'scratch operand']
  #allocation3 [shape = 'f32[128,1]{1,0:T(8,128)}', space=vmem, size = 0x10000, scoped, tag = 'scratch operand']
  #allocation4 [shape = 'f32[128,1]{1,0:T(8,128)}', space=vmem, size = 0x10000, scoped, tag = 'scratch operand']
  #allocation5 [shape = 'f32[128,128]{1,0:T(8,128)}', space=vmem, size = 0x10000, scoped, tag = 'scratch operand']
  %s0 = inlined_call_operand.vmem [shape: bf16[256,128], index: 0, kind: input, shape index: {}]
  %s1 = inlined_call_operand.hbm [shape: bf16[256,128], index: 1, kind: input, shape index: {}]
  %s2 = inlined_call_operand.hbm [shape: bf16[128,128], index: 2, kind: input, shape index: {}]
  %s3 = inlined_call_operand.vmem [shape: f32[1,128], index: 3, kind: input, shape index: {}]
  %s4 = inlined_call_operand.vmem [shape: f32[128,1], index: 4, kind: input, shape index: {}]
  %s5 = inlined_call_operand.vmem [shape: f32[1,128], index: 5, kind: input, shape index: {}]
  %s6 = inlined_call_operand.hbm [shape: bf16[256,256], index: 6, kind: input, shape index: {}]
  %s7 = inlined_call_operand.hbm [shape: f32[256,128], index: 7, kind: output, shape index: {}]
  %s8 = sld [smem:[#allocation0]]
  $region81: #{tpu_custom_call.1} parent=0
    _
  %s10 = ssub.s32 1, %s8
  %s11 = scalar_select 0, %s10, %s8
  $region1: #{tpu_custom_call.1} parent=0
    #allocation6 [shape = 'u8[65536]{0}', space=vmem, size = 0x10000, scoped, tag = 'input window, operand 1']
    #allocation7 [shape = 's32[2]{0}', space=sflag, size = 0x8, scoped, tag = 'scoped memory for tpu_custom_call.1']
    #allocation8 [shape = 's32[2]{0}', space=sflag, size = 0x8, scoped, tag = 'scoped memory for tpu_custom_call.1']
    #allocation9 [shape = 'u8[32768]{0}', space=vmem, size = 0x8000, scoped, tag = 'input window, operand 2, single buffered']
    #allocation10 [shape = 's32[1]{0}', space=sflag, size = 0x4, scoped, tag = 'scoped memory for tpu_custom_call.1']
    #allocation11 [shape = 'u8[65536]{0}', space=vmem, size = 0x10000, scoped, tag = 'input window, operand 6']
    #allocation12 [shape = 'u8[131072]{0}', space=vmem, size = 0x20000, scoped, tag = 'output window, operand 0']
    %12 = vsyncpa [#allocation7], 0
    %s13 = scalar_lea.sflag [#allocation7], 1
    %14 = vsyncpa %s13, 0
    %15 = vsyncpa [#allocation10], 0
    %16 = vsyncpa [#allocation8], 0
    %s17 = scalar_lea.sflag [#allocation8], 1
    %18 = vsyncpa %s17, 0
    loop: start=0, step=1, limit=6
    $region2: #{tpu_custom_call.1} parent=1 // loop_pre_header
      _
    $region3: #{tpu_custom_call.1} parent=1 // loop_header
      %s20 = sphi 0, %s24
      %p21 = scmp.ge.s32.totalorder %s20, 6
      %s27 = sphi 0, %s39
      %s28 = sphi 0, %s35
      %s29 = sphi 0, %s27
      %s30 = sphi 0, %s28
      %s31 = sphi 0, %s29
      %s32 = sphi 0, %s30
      %s42 = sphi 0, %s44
      %s45 = sphi 0, %s42
      %s46 = sphi 0, %s45
      %s62 = sphi 0, %s46
      %s68 = sphi 0, %s70
      %s71 = sphi 0, %s68
      %s72 = sphi 0, %s71
      %s88 = sphi 0, %s72
      %s92 = sphi 0, %s92
      %s94 = sphi 0, %s92
      %s95 = sphi 0, %s94
      %s109 = sphi 0, %s95
      %s113 = sphi 0, %s113
      %s115 = sphi 0, %s113
      %s116 = sphi 0, %s115
      %s130 = sphi 0, %s116
      %s134 = sphi 0, %s134
      %s136 = sphi 0, %s134
      %s137 = sphi 0, %s136
      %s151 = sphi 0, %s137
      %s155 = sphi 0, %s155
      %s157 = sphi 0, %s155
      %s158 = sphi 0, %s157
      %s172 = sphi 0, %s158
      %s180 = sphi 0, %s182
      %s183 = sphi 0, %s180
      %s184 = sphi 0, %s183
      %s200 = sphi 0, %s184
      %s206 = sphi 0, %s208
      %s209 = sphi 0, %s206
      %s210 = sphi 0, %s209
      %s226 = sphi 0, %s210
    $region4: #{tpu_custom_call.1} parent=1 // loop_header_branch
      %23 = sbr.rel (%p21) target = $region8
    $region5: #{tpu_custom_call.1} parent=1 // loop_body
      %s25 = ssub.s32 %s20, 1
      %s26 = ssub.s32 %s20, 2
      %s33 = sadd.s32 1, %s28
      %p34 = scmp.ge.s32.totalorder %s33, 2
      %s35 = scalar_select %p34, 0, %s33
      %s36 = sadd.s32 1, %s27
      %s37 = scalar_select %p34, %s36, %s27
      %p38 = scmp.ge.s32.totalorder %s37, 2
      %s39 = scalar_select %p38, 0, %s37
      %s40 = ssub.s32 %s27, %s39
      %p41 = scmp.eq.s32.totalorder %s40, 0
      %s43 = sadd.s32 %s42, 1
      %s44 = scalar_select %p41, %s42, %s43
      %p47 = pneg %p41
      %p48 = scmp.eq.s32.totalorder %s20, 3
      %p49 = por %p47, %p48
      %p50 = scmp.ne.s32.totalorder %s42, %s45
      %p51 = scmp.eq.s32.totalorder %s20, 0
      %p52 = por %p50, %p51
      %p53 = scmp.ne.s32.totalorder %s42, %s45
      %p54 = scmp.eq.s32.totalorder %s25, 3
      %p55 = por %p53, %p54
      %p56 = scmp.ne.s32.totalorder %s45, %s46
      %p57 = scmp.eq.s32.totalorder %s25, 0
      %p58 = por %p56, %p57
      %p59 = scmp.ne.s32.totalorder %s45, %s46
      %p60 = scmp.eq.s32.totalorder %s26, 3
      %p61 = por %p59, %p60
      %p63 = scmp.ne.s32.totalorder %s46, %s62
      %p64 = scmp.eq.s32.totalorder %s26, 0
      %p65 = por %p63, %p64
      %s66 = ssub.s32 %s28, %s35
      %p67 = scmp.eq.s32.totalorder %s66, 0
      %s69 = sadd.s32 %s68, 1
      %s70 = scalar_select %p67, %s68, %s69
      %p73 = pneg %p67
      %p74 = scmp.eq.s32.totalorder %s20, 3
      %p75 = por %p73, %p74
      %p76 = scmp.ne.s32.totalorder %s68, %s71
      %p77 = scmp.eq.s32.totalorder %s20, 0
      %p78 = por %p76, %p77
      %p79 = scmp.ne.s32.totalorder %s68, %s71
      %p80 = scmp.eq.s32.totalorder %s25, 3
      %p81 = por %p79, %p80
      %p82 = scmp.ne.s32.totalorder %s71, %s72
      %p83 = scmp.eq.s32.totalorder %s25, 0
      %p84 = por %p82, %p83
      %p85 = scmp.ne.s32.totalorder %s71, %s72
      %p86 = scmp.eq.s32.totalorder %s26, 3
      %p87 = por %p85, %p86
      %p89 = scmp.ne.s32.totalorder %s72, %s88
      %p90 = scmp.eq.s32.totalorder %s26, 0
      %p91 = por %p89, %p90
      %s93 = sadd.s32 %s92, 1
      %p96 = scmp.eq.s32.totalorder %s20, 3
      %p97 = scmp.ne.s32.totalorder %s92, %s94
      %p98 = scmp.eq.s32.totalorder %s20, 0
      %p99 = por %p97, %p98
      %p100 = scmp.ne.s32.totalorder %s92, %s94
      %p101 = scmp.eq.s32.totalorder %s25, 3
      %p102 = por %p100, %p101
      %p103 = scmp.ne.s32.totalorder %s94, %s95
      %p104 = scmp.eq.s32.totalorder %s25, 0
      %p105 = por %p103, %p104
      %p106 = scmp.ne.s32.totalorder %s94, %s95
      %p107 = scmp.eq.s32.totalorder %s26, 3
      %p108 = por %p106, %p107
      %p110 = scmp.ne.s32.totalorder %s95, %s109
      %p111 = scmp.eq.s32.totalorder %s26, 0
      %p112 = por %p110, %p111
      %s114 = sadd.s32 %s113, 1
      %p117 = scmp.eq.s32.totalorder %s20, 3
      %p118 = scmp.ne.s32.totalorder %s113, %s115
      %p119 = scmp.eq.s32.totalorder %s20, 0
      %p120 = por %p118, %p119
      %p121 = scmp.ne.s32.totalorder %s113, %s115
      %p122 = scmp.eq.s32.totalorder %s25, 3
      %p123 = por %p121, %p122
      %p124 = scmp.ne.s32.totalorder %s115, %s116
      %p125 = scmp.eq.s32.totalorder %s25, 0
      %p126 = por %p124, %p125
      %p127 = scmp.ne.s32.totalorder %s115, %s116
      %p128 = scmp.eq.s32.totalorder %s26, 3
      %p129 = por %p127, %p128
      %p131 = scmp.ne.s32.totalorder %s116, %s130
      %p132 = scmp.eq.s32.totalorder %s26, 0
      %p133 = por %p131, %p132
      %s135 = sadd.s32 %s134, 1
      %p138 = scmp.eq.s32.totalorder %s20, 3
      %p139 = scmp.ne.s32.totalorder %s134, %s136
      %p140 = scmp.eq.s32.totalorder %s20, 0
      %p141 = por %p139, %p140
      %p142 = scmp.ne.s32.totalorder %s134, %s136
      %p143 = scmp.eq.s32.totalorder %s25, 3
      %p144 = por %p142, %p143
      %p145 = scmp.ne.s32.totalorder %s136, %s137
      %p146 = scmp.eq.s32.totalorder %s25, 0
      %p147 = por %p145, %p146
      %p148 = scmp.ne.s32.totalorder %s136, %s137
      %p149 = scmp.eq.s32.totalorder %s26, 3
      %p150 = por %p148, %p149
      %p152 = scmp.ne.s32.totalorder %s137, %s151
      %p153 = scmp.eq.s32.totalorder %s26, 0
      %p154 = por %p152, %p153
      %s156 = sadd.s32 %s155, 1
      %p159 = scmp.eq.s32.totalorder %s20, 3
      %p160 = scmp.ne.s32.totalorder %s155, %s157
      %p161 = scmp.eq.s32.totalorder %s20, 0
      %p162 = por %p160, %p161
      %p163 = scmp.ne.s32.totalorder %s155, %s157
      %p164 = scmp.eq.s32.totalorder %s25, 3
      %p165 = por %p163, %p164
      %p166 = scmp.ne.s32.totalorder %s157, %s158
      %p167 = scmp.eq.s32.totalorder %s25, 0
      %p168 = por %p166, %p167
      %p169 = scmp.ne.s32.totalorder %s157, %s158
      %p170 = scmp.eq.s32.totalorder %s26, 3
      %p171 = por %p169, %p170
      %p173 = scmp.ne.s32.totalorder %s158, %s172
      %p174 = scmp.eq.s32.totalorder %s26, 0
      %p175 = por %p173, %p174
      %s176 = ssub.s32 %s27, %s39
      %s177 = ssub.s32 %s28, %s35
      %s178 = sor.u32 %s176, %s177
      %p179 = scmp.eq.s32.totalorder %s178, 0
      %s181 = sadd.s32 %s180, 1
      %s182 = scalar_select %p179, %s180, %s181
      %p185 = pneg %p179
      %p186 = scmp.eq.s32.totalorder %s20, 3
      %p187 = por %p185, %p186
      %p188 = scmp.ne.s32.totalorder %s180, %s183
      %p189 = scmp.eq.s32.totalorder %s20, 0
      %p190 = por %p188, %p189
      %p191 = scmp.ne.s32.totalorder %s180, %s183
      %p192 = scmp.eq.s32.totalorder %s25, 3
      %p193 = por %p191, %p192
      %p194 = scmp.ne.s32.totalorder %s183, %s184
      %p195 = scmp.eq.s32.totalorder %s25, 0
      %p196 = por %p194, %p195
      %p197 = scmp.ne.s32.totalorder %s183, %s184
      %p198 = scmp.eq.s32.totalorder %s26, 3
      %p199 = por %p197, %p198
      %p201 = scmp.ne.s32.totalorder %s184, %s200
      %p202 = scmp.eq.s32.totalorder %s26, 0
      %p203 = por %p201, %p202
      %s204 = ssub.s32 %s27, %s39
      %p205 = scmp.eq.s32.totalorder %s204, 0
      %s207 = sadd.s32 %s206, 1
      %s208 = scalar_select %p205, %s206, %s207
      %p211 = pneg %p205
      %p212 = scmp.eq.s32.totalorder %s20, 3
      %p213 = por %p211, %p212
      %p214 = scmp.ne.s32.totalorder %s206, %s209
      %p215 = scmp.eq.s32.totalorder %s20, 0
      %p216 = por %p214, %p215
      %p217 = scmp.ne.s32.totalorder %s206, %s209
      %p218 = scmp.eq.s32.totalorder %s25, 3
      %p219 = por %p217, %p218
      %p220 = scmp.ne.s32.totalorder %s209, %s210
      %p221 = scmp.eq.s32.totalorder %s25, 0
      %p222 = por %p220, %p221
      %p223 = scmp.ne.s32.totalorder %s209, %s210
      %p224 = scmp.eq.s32.totalorder %s26, 3
      %p225 = por %p223, %p224
      %p227 = scmp.ne.s32.totalorder %s210, %s226
      %p228 = scmp.eq.s32.totalorder %s26, 0
      %p229 = por %p227, %p228
      %p230 = scmp.le.s32.totalorder 1, %s20
      %p231 = scmp.lt.s32.totalorder %s20, 5
      %p232 = pnand %p230, %p231
      %p233 = pneg %p232
      // Predicated region
      $region9: #{tpu_custom_call.1} parent=5 // pred_check
        _
      $region10: #{tpu_custom_call.1} parent=5 // pred_check_branch
        %235 = sbr.rel (%p232) target = $region12
      $region11: #{tpu_custom_call.1} parent=5 // pred_region
        %s236 = ssub.s32 %s20, 1
        // Predicated region
        $region13: #{tpu_custom_call.1} parent=11 // pred_check
          %p237 = pneg %p105
        $region14: #{tpu_custom_call.1} parent=11 // pred_check_branch
          %239 = sbr.rel (%p237) target = $region16
        $region15: #{tpu_custom_call.1} parent=11 // pred_region
          %241 = vsyncadd [#allocation10], 0
          %s242 = sshll.u32 %s2, 4
          %s243 = int_to_ptr.hbm [resolvable:$true] %s242
          %s244 = sshll.u32 [#allocation9], 4
          %s245 = int_to_ptr.vmem [resolvable:$true] %s244
          %250 = dma.hbm_to_vmem [thread:$0]  %s243, 1024, %s245, [#allocation10], 64, 64, 4
        $region16: #{tpu_custom_call.1} parent=11 // pred_fallthru
          _
        // Predicated region
        $region17: #{tpu_custom_call.1} parent=11 // pred_check
          %p251 = pneg %p126
        $region18: #{tpu_custom_call.1} parent=11 // pred_check_branch
          %253 = sbr.rel (%p251) target = $region20
        $region19: #{tpu_custom_call.1} parent=11 // pred_region
          _
        $region20: #{tpu_custom_call.1} parent=11 // pred_fallthru
          _
        // Predicated region
        $region21: #{tpu_custom_call.1} parent=11 // pred_check
          %p254 = pneg %p147
        $region22: #{tpu_custom_call.1} parent=11 // pred_check_branch
          %256 = sbr.rel (%p254) target = $region24
        $region23: #{tpu_custom_call.1} parent=11 // pred_region
          _
        $region24: #{tpu_custom_call.1} parent=11 // pred_fallthru
          _
        // Predicated region
        $region25: #{tpu_custom_call.1} parent=11 // pred_check
          %p257 = pneg %p168
        $region26: #{tpu_custom_call.1} parent=11 // pred_check_branch
          %259 = sbr.rel (%p257) target = $region28
        $region27: #{tpu_custom_call.1} parent=11 // pred_region
          _
        $region28: #{tpu_custom_call.1} parent=11 // pred_fallthru
          _
      $region12: #{tpu_custom_call.1} parent=5 // pred_fallthru
        _
      %p260 = scmp.lt.s32.totalorder %s20, 4
      // Predicated region
      $region29: #{tpu_custom_call.1} parent=5 // pred_check
        %p261 = pneg %p260
      $region30: #{tpu_custom_call.1} parent=5 // pred_check_branch
        %263 = sbr.rel (%p261) target = $region32
      $region31: #{tpu_custom_call.1} parent=5 // pred_region
        // Predicated region
        $region33: #{tpu_custom_call.1} parent=31 // pred_check
          %p264 = pneg %p52
        $region34: #{tpu_custom_call.1} parent=31 // pred_check_branch
          %266 = sbr.rel (%p264) target = $region36
        $region35: #{tpu_custom_call.1} parent=31 // pred_region
          %s267 = smul.u32 16, %s27
          %p268 = scmp.lt.s32.totalorder %s267, 31
          %s269 = scalar_select %p268, %s267, 31
          %s270 = smul.addr %s269, 4
          %s271 = scalar_lea.vmem %s0, %s270
          %s272 = smul.u32 16, %s27
        $region36: #{tpu_custom_call.1} parent=31 // pred_fallthru
          _
        // Predicated region
        $region37: #{tpu_custom_call.1} parent=31 // pred_check
          %p273 = pneg %p78
        $region38: #{tpu_custom_call.1} parent=31 // pred_check_branch
          %275 = sbr.rel (%p273) target = $region40
        $region39: #{tpu_custom_call.1} parent=31 // pred_region
          %s276 = sand.u32 %s20, 1
          %s277 = scalar_lea.sflag [#allocation7], %s276
          %s278 = sand.u32 %s68, 1
          %s279 = smul.addr %s278, 64
          %s280 = scalar_lea.vmem [#allocation6], %s279
          %s281 = smul.u32 16, %s28
          %283 = vsyncadd %s277, 0
          %s284 = smul.addr %s281, 4
          %s285 = scalar_lea.hbm %s1, %s284
          %s286 = sshll.u32 %s285, 4
          %s287 = int_to_ptr.hbm [resolvable:$true] %s286
          %s288 = sshll.u32 %s280, 4
          %s289 = int_to_ptr.vmem [resolvable:$true] %s288
          %294 = dma.hbm_to_vmem [thread:$0]  %s287, 1024, %s289, %s277, 64, 64, 4
        $region40: #{tpu_custom_call.1} parent=31 // pred_fallthru
          _
        // Predicated region
        $region41: #{tpu_custom_call.1} parent=31 // pred_check
          %p295 = pneg %p190
        $region42: #{tpu_custom_call.1} parent=31 // pred_check_branch
          %297 = sbr.rel (%p295) target = $region44
        $region43: #{tpu_custom_call.1} parent=31 // pred_region
          %s298 = sand.u32 %s20, 1
          %s299 = scalar_lea.sflag [#allocation7], %s298
          %s300 = sand.u32 %s180, 1
          %s301 = smul.addr %s300, 64
          %s302 = scalar_lea.vmem [#allocation11], %s301
          %s303 = smul.u32 16, %s27
          %305 = vsyncadd %s299, 0
          %s306 = smul.addr %s303, 2
          %s307 = sadd.s32 %s28, %s306
          %s308 = smul.addr %s307, 4
          %s309 = scalar_lea.hbm %s6, %s308
          %s310 = sshll.u32 %s309, 4
          %s311 = int_to_ptr.hbm [resolvable:$true] %s310
          %s312 = sshll.u32 %s302, 4
          %s313 = int_to_ptr.vmem [resolvable:$true] %s312
          %318 = dma.hbm_to_vmem [thread:$0]  %s311, 1024, %s313, %s299, 128, 64, 4
        $region44: #{tpu_custom_call.1} parent=31 // pred_fallthru
          _
      $region32: #{tpu_custom_call.1} parent=5 // pred_fallthru
        _
      %p319 = scmp.le.s32.totalorder 1, %s20
      %p320 = scmp.lt.s32.totalorder %s20, 5
      %p321 = pnand %p319, %p320
      %p322 = pneg %p321
      // Predicated region
      $region45: #{tpu_custom_call.1} parent=5 // pred_check
        _
      $region46: #{tpu_custom_call.1} parent=5 // pred_check_branch
        %324 = sbr.rel (%p321) target = $region48
      $region47: #{tpu_custom_call.1} parent=5 // pred_region
        %s325 = ssub.s32 %s20, 1
        %s326 = sand.u32 %s25, 1
        %s327 = scalar_lea.sflag [#allocation7], %s326
        %s328 = sand.u32 %s71, 1
        %s329 = smul.addr %s328, 64
        %s330 = scalar_lea.vmem [#allocation6], %s329
        // Predicated region
        $region49: #{tpu_custom_call.1} parent=47 // pred_check
          %p331 = pneg %p84
        $region50: #{tpu_custom_call.1} parent=47 // pred_check_branch
          %333 = sbr.rel (%p331) target = $region52
        $region51: #{tpu_custom_call.1} parent=47 // pred_region
          %335 = dma.done %s327, 1024
        $region52: #{tpu_custom_call.1} parent=47 // pred_fallthru
          _
        // Predicated region
        $region53: #{tpu_custom_call.1} parent=47 // pred_check
          %p336 = pneg %p105
        $region54: #{tpu_custom_call.1} parent=47 // pred_check_branch
          %338 = sbr.rel (%p336) target = $region56
        $region55: #{tpu_custom_call.1} parent=47 // pred_region
          %340 = dma.done [#allocation10], 1024
        $region56: #{tpu_custom_call.1} parent=47 // pred_fallthru
          _
        %s341 = sand.u32 %s25, 1
        %s342 = scalar_lea.sflag [#allocation7], %s341
        %s343 = sand.u32 %s183, 1
        %s344 = smul.addr %s343, 64
        %s345 = scalar_lea.vmem [#allocation11], %s344
        // Predicated region
        $region57: #{tpu_custom_call.1} parent=47 // pred_check
          %p346 = pneg %p196
        $region58: #{tpu_custom_call.1} parent=47 // pred_check_branch
          %348 = sbr.rel (%p346) target = $region60
        $region59: #{tpu_custom_call.1} parent=47 // pred_region
          %350 = dma.done %s342, 1024
        $region60: #{tpu_custom_call.1} parent=47 // pred_fallthru
          _
        %s351 = smul.u32 16, %s29
        %p352 = scmp.lt.s32.totalorder %s351, 31
        %s353 = scalar_select %p352, %s351, 31
        %s354 = smul.addr %s353, 4
        %s355 = scalar_lea.vmem %s0, %s354
        %p356 = pneg %p58
        %p357 = pneg %p55
        %s358 = sand.u32 %s25, 1
        %s359 = scalar_lea.sflag [#allocation7], %s358
        %s360 = sand.u32 %s71, 1
        %s361 = smul.addr %s360, 64
        %s362 = scalar_lea.vmem [#allocation6], %s361
        %p363 = pneg %p84
        %p364 = pneg %p81
        %p365 = pneg %p105
        %p366 = pneg %p102
        %p367 = pneg %p126
        %p368 = pneg %p123
        %p369 = pneg %p147
        %p370 = pneg %p144
        %p371 = pneg %p168
        %p372 = pneg %p165
        %s373 = sand.u32 %s25, 1
        %s374 = scalar_lea.sflag [#allocation7], %s373
        %s375 = sand.u32 %s183, 1
        %s376 = smul.addr %s375, 64
        %s377 = scalar_lea.vmem [#allocation11], %s376
        %p378 = pneg %p196
        %p379 = pneg %p193
        %p380 = pneg %p222
        %p381 = pneg %p219
        %s382 = sand.u32 %s209, 1
        %s383 = scalar_lea.sflag [#allocation8], %s382
        %s384 = sand.u32 %s209, 1
        %s385 = smul.addr %s384, 128
        %s386 = scalar_lea.vmem [#allocation12], %s385
        %s387 = smul.u32 16, %s29
        %p388 = scmp.lt.s32.totalorder %s387, 31
        %s389 = scalar_select %p388, %s387, 31
        %s390 = smul.addr %s389, 4
        %s391 = scalar_lea.vmem %s0, %s390
        %s392 = smul.u32 16, %s29
        %s393 = smul.u32 16, %s30
        %s394 = smul.u32 16, %s29
        %s395 = smul.u32 16, %s29
        %p396 = scmp.eq.s32.totalorder %s30, 0
        // Predicated region
        $region61: #{tpu_custom_call.1} parent=47 // pred_check
          %p397 = pneg %p396
        $region62: #{tpu_custom_call.1} parent=47 // pred_check_branch
          %399 = sbr.rel (%p397) target = $region64
        $region63: #{tpu_custom_call.1} parent=47 // pred_region
          %v400 = vld [vmem:[%s391] sm:$0xf]
          %v401 = vld [vmem:[%s391 + $0x4] sm:$0xf]
          %v402 = vld [vmem:[%s391 + $0x8] sm:$0xf]
          %v403 = vld [vmem:[%s391 + $0xc] sm:$0xf]
          %v404 = vld [vmem:[%s391 + $0x10] sm:$0xf]
          %v405 = vld [vmem:[%s391 + $0x14] sm:$0xf]
          %v406 = vld [vmem:[%s391 + $0x18] sm:$0xf]
          %v407 = vld [vmem:[%s391 + $0x1c] sm:$0xf]
          %v408 = vld [vmem:[%s391 + $0x20] sm:$0xf]
          %v409 = vld [vmem:[%s391 + $0x24] sm:$0xf]
          %v410 = vld [vmem:[%s391 + $0x28] sm:$0xf]
          %v411 = vld [vmem:[%s391 + $0x2c] sm:$0xf]
          %v412 = vld [vmem:[%s391 + $0x30] sm:$0xf]
          %v413 = vld [vmem:[%s391 + $0x34] sm:$0xf]
          %v414 = vld [vmem:[%s391 + $0x38] sm:$0xf]
          %v415 = vld [vmem:[%s391 + $0x3c] sm:$0xf]
          %v416 = vld [vmem:[#allocation9] sm:$0xf]
          %v417 = vld [vmem:[#allocation9 + $0x4] sm:$0xf]
          %v418 = vld [vmem:[#allocation9 + $0x8] sm:$0xf]
          %v419 = vld [vmem:[#allocation9 + $0xc] sm:$0xf]
          %v420 = vld [vmem:[#allocation9 + $0x10] sm:$0xf]
          %v421 = vld [vmem:[#allocation9 + $0x14] sm:$0xf]
          %v422 = vld [vmem:[#allocation9 + $0x18] sm:$0xf]
          %v423 = vld [vmem:[#allocation9 + $0x1c] sm:$0xf]
          %v424 = vld [vmem:[#allocation9 + $0x20] sm:$0xf]
          %v425 = vld [vmem:[#allocation9 + $0x24] sm:$0xf]
          %v426 = vld [vmem:[#allocation9 + $0x28] sm:$0xf]
          %v427 = vld [vmem:[#allocation9 + $0x2c] sm:$0xf]
          %v428 = vld [vmem:[#allocation9 + $0x30] sm:$0xf]
          %v429 = vld [vmem:[#allocation9 + $0x34] sm:$0xf]
          %v430 = vld [vmem:[#allocation9 + $0x38] sm:$0xf]
          %v431 = vld [vmem:[#allocation9 + $0x3c] sm:$0xf]
          %v448 = vunpack.c.l.b16 %v400
          %v449 = vunpack.c.l.b16 %v401
          %v450 = vunpack.c.l.b16 %v402
          %v451 = vunpack.c.l.b16 %v403
          %v452 = vunpack.c.l.b16 %v404
          %v453 = vunpack.c.l.b16 %v405
          %v454 = vunpack.c.l.b16 %v406
          %v455 = vunpack.c.l.b16 %v407
          %v456 = vunpack.c.l.b16 %v408
          %v457 = vunpack.c.l.b16 %v409
          %v458 = vunpack.c.l.b16 %v410
          %v459 = vunpack.c.l.b16 %v411
          %v460 = vunpack.c.l.b16 %v412
          %v461 = vunpack.c.l.b16 %v413
          %v462 = vunpack.c.l.b16 %v414
          %v463 = vunpack.c.l.b16 %v415
          %v464 = vpack.c.b16 %v449, %v448
          %v465 = vpack.c.b16 %v451, %v450
          %v466 = vpack.c.b16 %v453, %v452
          %v467 = vpack.c.b16 %v455, %v454
          %v468 = vpack.c.b16 %v457, %v456
          %v469 = vpack.c.b16 %v459, %v458
          %v470 = vpack.c.b16 %v461, %v460
          %v471 = vpack.c.b16 %v463, %v462
          %v496 = vunpack.c.l.b16 %v416
          %v497 = vunpack.c.l.b16 %v417
          %v498 = vunpack.c.l.b16 %v418
          %v499 = vunpack.c.l.b16 %v419
          %v500 = vunpack.c.l.b16 %v420
          %v501 = vunpack.c.l.b16 %v421
          %v502 = vunpack.c.l.b16 %v422
          %v503 = vunpack.c.l.b16 %v423
          %v504 = vunpack.c.l.b16 %v424
          %v505 = vunpack.c.l.b16 %v425
          %v506 = vunpack.c.l.b16 %v426
          %v507 = vunpack.c.l.b16 %v427
          %v508 = vunpack.c.l.b16 %v428
          %v509 = vunpack.c.l.b16 %v429
          %v510 = vunpack.c.l.b16 %v430
          %v511 = vunpack.c.l.b16 %v431
          %v512 = vpack.c.b16 %v497, %v496
          %v513 = vpack.c.b16 %v499, %v498
          %v514 = vpack.c.b16 %v501, %v500
          %v515 = vpack.c.b16 %v503, %v502
          %v516 = vpack.c.b16 %v505, %v504
          %v517 = vpack.c.b16 %v507, %v506
          %v518 = vpack.c.b16 %v509, %v508
          %v519 = vpack.c.b16 %v511, %v510
          %528 = vmatpush.bf16.msra.mxu0 %v519
          %529 = vmatpush.bf16.msra.mxu0 %v518
          %530 = vmatpush.bf16.msra.mxu0 %v517
          %531 = vmatpush.bf16.msra.mxu0 %v516
          %532 = vmatpush.bf16.msra.mxu0 %v515
          %533 = vmatpush.bf16.msra.mxu0 %v514
          %534 = vmatpush.bf16.msra.mxu0 %v513
          %535 = vmatpush.bf16.msra.mxu0 %v512
          %536 = vmatmul.bf16.gmra.mxu0 %v464
          %v537 = vpop.f32.mrf.mxu0
          %v538 = vadd.f32 0.0, %v537
          %v539 = vpop.f32.mrf.mxu0
          %v540 = vadd.f32 0.0, %v539
          %541 = vmatmul.bf16.gmra.mxu0 %v465
          %v542 = vpop.f32.mrf.mxu0
          %v543 = vadd.f32 0.0, %v542
          %v544 = vpop.f32.mrf.mxu0
          %v545 = vadd.f32 0.0, %v544
          %546 = vmatmul.bf16.gmra.mxu0 %v466
          %v547 = vpop.f32.mrf.mxu0
          %v548 = vadd.f32 0.0, %v547
          %v549 = vpop.f32.mrf.mxu0
          %v550 = vadd.f32 0.0, %v549
          %551 = vmatmul.bf16.gmra.mxu0 %v467
          %v552 = vpop.f32.mrf.mxu0
          %v553 = vadd.f32 0.0, %v552
          %v554 = vpop.f32.mrf.mxu0
          %v555 = vadd.f32 0.0, %v554
          %556 = vmatmul.bf16.gmra.mxu0 %v468
          %v557 = vpop.f32.mrf.mxu0
          %v558 = vadd.f32 0.0, %v557
          %v559 = vpop.f32.mrf.mxu0
          %v560 = vadd.f32 0.0, %v559
          %561 = vmatmul.bf16.gmra.mxu0 %v469
          %v562 = vpop.f32.mrf.mxu0
          %v563 = vadd.f32 0.0, %v562
          %v564 = vpop.f32.mrf.mxu0
          %v565 = vadd.f32 0.0, %v564
          %566 = vmatmul.bf16.gmra.mxu0 %v470
          %v567 = vpop.f32.mrf.mxu0
          %v568 = vadd.f32 0.0, %v567
          %v569 = vpop.f32.mrf.mxu0
          %v570 = vadd.f32 0.0, %v569
          %571 = vmatmul.bf16.gmra.mxu0 %v471
          %v572 = vpop.f32.mrf.mxu0
          %v573 = vadd.f32 0.0, %v572
          %v574 = vpop.f32.mrf.mxu0
          %v575 = vadd.f32 0.0, %v574
          %576 = vdwg.mxu0
          %577 = vst [vmem:[#allocation2] sm:$0xff] %v538
          %578 = vst [vmem:[#allocation2 + $0x8] sm:$0xff] %v540
          %579 = vst [vmem:[#allocation2 + $0x10] sm:$0xff] %v543
          %580 = vst [vmem:[#allocation2 + $0x18] sm:$0xff] %v545
          %581 = vst [vmem:[#allocation2 + $0x20] sm:$0xff] %v548
          %582 = vst [vmem:[#allocation2 + $0x28] sm:$0xff] %v550
          %583 = vst [vmem:[#allocation2 + $0x30] sm:$0xff] %v553
          %584 = vst [vmem:[#allocation2 + $0x38] sm:$0xff] %v555
          %585 = vst [vmem:[#allocation2 + $0x40] sm:$0xff] %v558
          %586 = vst [vmem:[#allocation2 + $0x48] sm:$0xff] %v560
          %587 = vst [vmem:[#allocation2 + $0x50] sm:$0xff] %v563
          %588 = vst [vmem:[#allocation2 + $0x58] sm:$0xff] %v565
          %589 = vst [vmem:[#allocation2 + $0x60] sm:$0xff] %v568
          %590 = vst [vmem:[#allocation2 + $0x68] sm:$0xff] %v570
          %591 = vst [vmem:[#allocation2 + $0x70] sm:$0xff] %v573
          %592 = vst [vmem:[#allocation2 + $0x78] sm:$0xff] %v575
          %vm593 = vcmask 7168
          %594 = vst.msk [vmem:[#allocation3] sm:$0xff] %vm593, -inf
          %595 = vst.msk [vmem:[#allocation3 + $0x8] sm:$0xff] %vm593, -inf
          %596 = vst.msk [vmem:[#allocation3 + $0x10] sm:$0xff] %vm593, -inf
          %597 = vst.msk [vmem:[#allocation3 + $0x18] sm:$0xff] %vm593, -inf
          %598 = vst.msk [vmem:[#allocation3 + $0x20] sm:$0xff] %vm593, -inf
          %599 = vst.msk [vmem:[#allocation3 + $0x28] sm:$0xff] %vm593, -inf
          %600 = vst.msk [vmem:[#allocation3 + $0x30] sm:$0xff] %vm593, -inf
          %601 = vst.msk [vmem:[#allocation3 + $0x38] sm:$0xff] %vm593, -inf
          %602 = vst.msk [vmem:[#allocation3 + $0x40] sm:$0xff] %vm593, -inf
          %603 = vst.msk [vmem:[#allocation3 + $0x48] sm:$0xff] %vm593, -inf
          %604 = vst.msk [vmem:[#allocation3 + $0x50] sm:$0xff] %vm593, -inf
          %605 = vst.msk [vmem:[#allocation3 + $0x58] sm:$0xff] %vm593, -inf
          %606 = vst.msk [vmem:[#allocation3 + $0x60] sm:$0xff] %vm593, -inf
          %607 = vst.msk [vmem:[#allocation3 + $0x68] sm:$0xff] %vm593, -inf
          %608 = vst.msk [vmem:[#allocation3 + $0x70] sm:$0xff] %vm593, -inf
          %609 = vst.msk [vmem:[#allocation3 + $0x78] sm:$0xff] %vm593, -inf
          %610 = vst.msk [vmem:[#allocation4] sm:$0xff] %vm593, 0.0
          %611 = vst.msk [vmem:[#allocation4 + $0x8] sm:$0xff] %vm593, 0.0
          %612 = vst.msk [vmem:[#allocation4 + $0x10] sm:$0xff] %vm593, 0.0
          %613 = vst.msk [vmem:[#allocation4 + $0x18] sm:$0xff] %vm593, 0.0
          %614 = vst.msk [vmem:[#allocation4 + $0x20] sm:$0xff] %vm593, 0.0
          %615 = vst.msk [vmem:[#allocation4 + $0x28] sm:$0xff] %vm593, 0.0
          %616 = vst.msk [vmem:[#allocation4 + $0x30] sm:$0xff] %vm593, 0.0
          %617 = vst.msk [vmem:[#allocation4 + $0x38] sm:$0xff] %vm593, 0.0
          %618 = vst.msk [vmem:[#allocation4 + $0x40] sm:$0xff] %vm593, 0.0
          %619 = vst.msk [vmem:[#allocation4 + $0x48] sm:$0xff] %vm593, 0.0
          %620 = vst.msk [vmem:[#allocation4 + $0x50] sm:$0xff] %vm593, 0.0
          %621 = vst.msk [vmem:[#allocation4 + $0x58] sm:$0xff] %vm593, 0.0
          %622 = vst.msk [vmem:[#allocation4 + $0x60] sm:$0xff] %vm593, 0.0
          %623 = vst.msk [vmem:[#allocation4 + $0x68] sm:$0xff] %vm593, 0.0
          %624 = vst.msk [vmem:[#allocation4 + $0x70] sm:$0xff] %vm593, 0.0
          %625 = vst.msk [vmem:[#allocation4 + $0x78] sm:$0xff] %vm593, 0.0
          %626 = vst [vmem:[#allocation5] sm:$0xff] 0.0
          %627 = vst [vmem:[#allocation5 + $0x8] sm:$0xff] 0.0
          %628 = vst [vmem:[#allocation5 + $0x10] sm:$0xff] 0.0
          %629 = vst [vmem:[#allocation5 + $0x18] sm:$0xff] 0.0
          %630 = vst [vmem:[#allocation5 + $0x20] sm:$0xff] 0.0
          %631 = vst [vmem:[#allocation5 + $0x28] sm:$0xff] 0.0
          %632 = vst [vmem:[#allocation5 + $0x30] sm:$0xff] 0.0
          %633 = vst [vmem:[#allocation5 + $0x38] sm:$0xff] 0.0
          %634 = vst [vmem:[#allocation5 + $0x40] sm:$0xff] 0.0
          %635 = vst [vmem:[#allocation5 + $0x48] sm:$0xff] 0.0
          %636 = vst [vmem:[#allocation5 + $0x50] sm:$0xff] 0.0
          %637 = vst [vmem:[#allocation5 + $0x58] sm:$0xff] 0.0
          %638 = vst [vmem:[#allocation5 + $0x60] sm:$0xff] 0.0
          %639 = vst [vmem:[#allocation5 + $0x68] sm:$0xff] 0.0
          %640 = vst [vmem:[#allocation5 + $0x70] sm:$0xff] 0.0
          %641 = vst [vmem:[#allocation5 + $0x78] sm:$0xff] 0.0
        $region64: #{tpu_custom_call.1} parent=47 // pred_fallthru
          _
        %v642 = vld [vmem:[#allocation2] sm:$0xff]
        %v643 = vld [vmem:[#allocation2 + $0x8] sm:$0xff]
        %v644 = vld [vmem:[#allocation2 + $0x10] sm:$0xff]
        %v645 = vld [vmem:[#allocation2 + $0x18] sm:$0xff]
        %v646 = vld [vmem:[#allocation2 + $0x20] sm:$0xff]
        %v647 = vld [vmem:[#allocation2 + $0x28] sm:$0xff]
        %v648 = vld [vmem:[#allocation2 + $0x30] sm:$0xff]
        %v649 = vld [vmem:[#allocation2 + $0x38] sm:$0xff]
        %v650 = vld [vmem:[#allocation2 + $0x40] sm:$0xff]
        %v651 = vld [vmem:[#allocation2 + $0x48] sm:$0xff]
        %v652 = vld [vmem:[#allocation2 + $0x50] sm:$0xff]
        %v653 = vld [vmem:[#allocation2 + $0x58] sm:$0xff]
        %v654 = vld [vmem:[#allocation2 + $0x60] sm:$0xff]
        %v655 = vld [vmem:[#allocation2 + $0x68] sm:$0xff]
        %v656 = vld [vmem:[#allocation2 + $0x70] sm:$0xff]
        %v657 = vld [vmem:[#allocation2 + $0x78] sm:$0xff]
        %v658 = vld [vmem:[%s330] sm:$0xf]
        %v659 = vld [vmem:[%s330 + $0x4] sm:$0xf]
        %v660 = vld [vmem:[%s330 + $0x8] sm:$0xf]
        %v661 = vld [vmem:[%s330 + $0xc] sm:$0xf]
        %v662 = vld [vmem:[%s330 + $0x10] sm:$0xf]
        %v663 = vld [vmem:[%s330 + $0x14] sm:$0xf]
        %v664 = vld [vmem:[%s330 + $0x18] sm:$0xf]
        %v665 = vld [vmem:[%s330 + $0x1c] sm:$0xf]
        %v666 = vld [vmem:[%s330 + $0x20] sm:$0xf]
        %v667 = vld [vmem:[%s330 + $0x24] sm:$0xf]
        %v668 = vld [vmem:[%s330 + $0x28] sm:$0xf]
        %v669 = vld [vmem:[%s330 + $0x2c] sm:$0xf]
        %v670 = vld [vmem:[%s330 + $0x30] sm:$0xf]
        %v671 = vld [vmem:[%s330 + $0x34] sm:$0xf]
        %v672 = vld [vmem:[%s330 + $0x38] sm:$0xf]
        %v673 = vld [vmem:[%s330 + $0x3c] sm:$0xf]
        %v674 = vld [vmem:[#allocation9] sm:$0xf]
        %v675 = vld [vmem:[#allocation9 + $0x4] sm:$0xf]
        %v676 = vld [vmem:[#allocation9 + $0x8] sm:$0xf]
        %v677 = vld [vmem:[#allocation9 + $0xc] sm:$0xf]
        %v678 = vld [vmem:[#allocation9 + $0x10] sm:$0xf]
        %v679 = vld [vmem:[#allocation9 + $0x14] sm:$0xf]
        %v680 = vld [vmem:[#allocation9 + $0x18] sm:$0xf]
        %v681 = vld [vmem:[#allocation9 + $0x1c] sm:$0xf]
        %v682 = vld [vmem:[#allocation9 + $0x20] sm:$0xf]
        %v683 = vld [vmem:[#allocation9 + $0x24] sm:$0xf]
        %v684 = vld [vmem:[#allocation9 + $0x28] sm:$0xf]
        %v685 = vld [vmem:[#allocation9 + $0x2c] sm:$0xf]
        %v686 = vld [vmem:[#allocation9 + $0x30] sm:$0xf]
        %v687 = vld [vmem:[#allocation9 + $0x34] sm:$0xf]
        %v688 = vld [vmem:[#allocation9 + $0x38] sm:$0xf]
        %v689 = vld [vmem:[#allocation9 + $0x3c] sm:$0xf]
        %v706 = vunpack.c.l.b16 %v658
        %v707 = vunpack.c.l.b16 %v659
        %v708 = vunpack.c.l.b16 %v660
        %v709 = vunpack.c.l.b16 %v661
        %v710 = vunpack.c.l.b16 %v662
        %v711 = vunpack.c.l.b16 %v663
        %v712 = vunpack.c.l.b16 %v664
        %v713 = vunpack.c.l.b16 %v665
        %v714 = vunpack.c.l.b16 %v666
        %v715 = vunpack.c.l.b16 %v667
        %v716 = vunpack.c.l.b16 %v668
        %v717 = vunpack.c.l.b16 %v669
        %v718 = vunpack.c.l.b16 %v670
        %v719 = vunpack.c.l.b16 %v671
        %v720 = vunpack.c.l.b16 %v672
        %v721 = vunpack.c.l.b16 %v673
        %v722 = vpack.c.b16 %v707, %v706
        %v723 = vpack.c.b16 %v709, %v708
        %v724 = vpack.c.b16 %v711, %v710
        %v725 = vpack.c.b16 %v713, %v712
        %v726 = vpack.c.b16 %v715, %v714
        %v727 = vpack.c.b16 %v717, %v716
        %v728 = vpack.c.b16 %v719, %v718
        %v729 = vpack.c.b16 %v721, %v720
        %v754 = vunpack.c.l.b16 %v674
        %v755 = vunpack.c.l.b16 %v675
        %v756 = vunpack.c.l.b16 %v676
        %v757 = vunpack.c.l.b16 %v677
        %v758 = vunpack.c.l.b16 %v678
        %v759 = vunpack.c.l.b16 %v679
        %v760 = vunpack.c.l.b16 %v680
        %v761 = vunpack.c.l.b16 %v681
        %v762 = vunpack.c.l.b16 %v682
        %v763 = vunpack.c.l.b16 %v683
        %v764 = vunpack.c.l.b16 %v684
        %v765 = vunpack.c.l.b16 %v685
        %v766 = vunpack.c.l.b16 %v686
        %v767 = vunpack.c.l.b16 %v687
        %v768 = vunpack.c.l.b16 %v688
        %v769 = vunpack.c.l.b16 %v689
        %v770 = vpack.c.b16 %v755, %v754
        %v771 = vpack.c.b16 %v757, %v756
        %v772 = vpack.c.b16 %v759, %v758
        %v773 = vpack.c.b16 %v761, %v760
        %v774 = vpack.c.b16 %v763, %v762
        %v775 = vpack.c.b16 %v765, %v764
        %v776 = vpack.c.b16 %v767, %v766
        %v777 = vpack.c.b16 %v769, %v768
        %786 = vmatpush.bf16.msra.mxu0 %v777
        %787 = vmatpush.bf16.msra.mxu0 %v776
        %788 = vmatpush.bf16.msra.mxu0 %v775
        %789 = vmatpush.bf16.msra.mxu0 %v774
        %790 = vmatpush.bf16.msra.mxu0 %v773
        %791 = vmatpush.bf16.msra.mxu0 %v772
        %792 = vmatpush.bf16.msra.mxu0 %v771
        %793 = vmatpush.bf16.msra.mxu0 %v770
        %794 = vmatmul.bf16.gmra.mxu0 %v722
        %v795 = vpop.f32.mrf.mxu0
        %v796 = vadd.f32 0.0, %v795
        %v797 = vpop.f32.mrf.mxu0
        %v798 = vadd.f32 0.0, %v797
        %799 = vmatmul.bf16.gmra.mxu0 %v723
        %v800 = vpop.f32.mrf.mxu0
        %v801 = vadd.f32 0.0, %v800
        %v802 = vpop.f32.mrf.mxu0
        %v803 = vadd.f32 0.0, %v802
        %804 = vmatmul.bf16.gmra.mxu0 %v724
        %v805 = vpop.f32.mrf.mxu0
        %v806 = vadd.f32 0.0, %v805
        %v807 = vpop.f32.mrf.mxu0
        %v808 = vadd.f32 0.0, %v807
        %809 = vmatmul.bf16.gmra.mxu0 %v725
        %v810 = vpop.f32.mrf.mxu0
        %v811 = vadd.f32 0.0, %v810
        %v812 = vpop.f32.mrf.mxu0
        %v813 = vadd.f32 0.0, %v812
        %814 = vmatmul.bf16.gmra.mxu0 %v726
        %v815 = vpop.f32.mrf.mxu0
        %v816 = vadd.f32 0.0, %v815
        %v817 = vpop.f32.mrf.mxu0
        %v818 = vadd.f32 0.0, %v817
        %819 = vmatmul.bf16.gmra.mxu0 %v727
        %v820 = vpop.f32.mrf.mxu0
        %v821 = vadd.f32 0.0, %v820
        %v822 = vpop.f32.mrf.mxu0
        %v823 = vadd.f32 0.0, %v822
        %824 = vmatmul.bf16.gmra.mxu0 %v728
        %v825 = vpop.f32.mrf.mxu0
        %v826 = vadd.f32 0.0, %v825
        %v827 = vpop.f32.mrf.mxu0
        %v828 = vadd.f32 0.0, %v827
        %829 = vmatmul.bf16.gmra.mxu0 %v729
        %v830 = vpop.f32.mrf.mxu0
        %v831 = vadd.f32 0.0, %v830
        %v832 = vpop.f32.mrf.mxu0
        %v833 = vadd.f32 0.0, %v832
        %834 = vdwg.mxu0
        %v835 = vld [vmem:[%s4] sm:$0xff]
        %v836 = vld [vmem:[%s4 + $0x8] sm:$0xff]
        %v837 = vld [vmem:[%s4 + $0x10] sm:$0xff]
        %v838 = vld [vmem:[%s4 + $0x18] sm:$0xff]
        %v839 = vld [vmem:[%s4 + $0x20] sm:$0xff]
        %v840 = vld [vmem:[%s4 + $0x28] sm:$0xff]
        %v841 = vld [vmem:[%s4 + $0x30] sm:$0xff]
        %v842 = vld [vmem:[%s4 + $0x38] sm:$0xff]
        %v843 = vld [vmem:[%s4 + $0x40] sm:$0xff]
        %v844 = vld [vmem:[%s4 + $0x48] sm:$0xff]
        %v845 = vld [vmem:[%s4 + $0x50] sm:$0xff]
        %v846 = vld [vmem:[%s4 + $0x58] sm:$0xff]
        %v847 = vld [vmem:[%s4 + $0x60] sm:$0xff]
        %v848 = vld [vmem:[%s4 + $0x68] sm:$0xff]
        %v849 = vld [vmem:[%s4 + $0x70] sm:$0xff]
        %v850 = vld [vmem:[%s4 + $0x78] sm:$0xff]
        %851 = vmatpush.msra.mxu0 %v850
        %852 = vmatpush.msra.mxu0 %v849
        %853 = vmatpush.msra.mxu0 %v848
        %854 = vmatpush.msra.mxu0 %v847
        %855 = vmatpush.msra.mxu0 %v846
        %856 = vmatpush.msra.mxu0 %v845
        %857 = vmatpush.msra.mxu0 %v844
        %858 = vmatpush.msra.mxu0 %v843
        %859 = vmatpush.msra.mxu0 %v842
        %860 = vmatpush.msra.mxu0 %v841
        %861 = vmatpush.msra.mxu0 %v840
        %862 = vmatpush.msra.mxu0 %v839
        %863 = vmatpush.msra.mxu0 %v838
        %864 = vmatpush.msra.mxu0 %v837
        %865 = vmatpush.msra.mxu0 %v836
        %866 = vmatpush.msra.mxu0 %v835
        %867 = vmatmul.f32.gmra.mxu0 %v642
        %v868 = vpop.f32.mrf.mxu0
        %v869 = vadd.f32 0.0, %v868
        %870 = vmatmul.f32.gmra.mxu0 %v643
        %v871 = vpop.f32.mrf.mxu0
        %v872 = vadd.f32 0.0, %v871
        %873 = vmatmul.f32.gmra.mxu0 %v644
        %v874 = vpop.f32.mrf.mxu0
        %v875 = vadd.f32 0.0, %v874
        %876 = vmatmul.f32.gmra.mxu0 %v645
        %v877 = vpop.f32.mrf.mxu0
        %v878 = vadd.f32 0.0, %v877
        %879 = vmatmul.f32.gmra.mxu0 %v646
        %v880 = vpop.f32.mrf.mxu0
        %v881 = vadd.f32 0.0, %v880
        %882 = vmatmul.f32.gmra.mxu0 %v647
        %v883 = vpop.f32.mrf.mxu0
        %v884 = vadd.f32 0.0, %v883
        %885 = vmatmul.f32.gmra.mxu0 %v648
        %v886 = vpop.f32.mrf.mxu0
        %v887 = vadd.f32 0.0, %v886
        %888 = vmatmul.f32.gmra.mxu0 %v649
        %v889 = vpop.f32.mrf.mxu0
        %v890 = vadd.f32 0.0, %v889
        %891 = vmatmul.f32.gmra.mxu0 %v650
        %v892 = vpop.f32.mrf.mxu0
        %v893 = vadd.f32 0.0, %v892
        %894 = vmatmul.f32.gmra.mxu0 %v651
        %v895 = vpop.f32.mrf.mxu0
        %v896 = vadd.f32 0.0, %v895
        %897 = vmatmul.f32.gmra.mxu0 %v652
        %v898 = vpop.f32.mrf.mxu0
        %v899 = vadd.f32 0.0, %v898
        %900 = vmatmul.f32.gmra.mxu0 %v653
        %v901 = vpop.f32.mrf.mxu0
        %v902 = vadd.f32 0.0, %v901
        %903 = vmatmul.f32.gmra.mxu0 %v654
        %v904 = vpop.f32.mrf.mxu0
        %v905 = vadd.f32 0.0, %v904
        %906 = vmatmul.f32.gmra.mxu0 %v655
        %v907 = vpop.f32.mrf.mxu0
        %v908 = vadd.f32 0.0, %v907
        %909 = vmatmul.f32.gmra.mxu0 %v656
        %v910 = vpop.f32.mrf.mxu0
        %v911 = vadd.f32 0.0, %v910
        %912 = vmatmul.f32.gmra.mxu0 %v657
        %v913 = vpop.f32.mrf.mxu0
        %v914 = vadd.f32 0.0, %v913
        %915 = vdwg.mxu0
        %v916 = vld [vmem:[%s3] sm:$0x1]
        %917 = vmatpush.xpose.msra.mxu0 %v833
        %918 = vmatpush.xpose.msra.mxu0 %v831
        %919 = vmatpush.xpose.msra.mxu0 %v828
        %920 = vmatpush.xpose.msra.mxu0 %v826
        %921 = vmatpush.xpose.msra.mxu0 %v823
        %922 = vmatpush.xpose.msra.mxu0 %v821
        %923 = vmatpush.xpose.msra.mxu0 %v818
        %924 = vmatpush.xpose.msra.mxu0 %v816
        %925 = vmatpush.xpose.msra.mxu0 %v813
        %926 = vmatpush.xpose.msra.mxu0 %v811
        %927 = vmatpush.xpose.msra.mxu0 %v808
        %928 = vmatpush.xpose.msra.mxu0 %v806
        %929 = vmatpush.xpose.msra.mxu0 %v803
        %930 = vmatpush.xpose.msra.mxu0 %v801
        %931 = vmatpush.xpose.msra.mxu0 %v798
        %932 = vmatpush.xpose.msra.mxu0 %v796
        %933 = vmatmul.f32.gmra.mxu0 %v916
        %v934 = vpop.f32.mrf.mxu0
        %v935 = vadd.f32 0.0, %v934
        %936 = vdwg.mxu0
        %938 = vset.pattern.permute.xlu0 0
        %939 = vperm.xlu0 %938, %v869
        %v940 = vpop.permute.xlu0 %939
        %943 = vset.pattern.permute.xlu0 0
        %944 = vperm.xlu0 %943, %v872
        %v945 = vpop.permute.xlu0 %944
        %948 = vset.pattern.permute.xlu0 0
        %949 = vperm.xlu0 %948, %v875
        %v950 = vpop.permute.xlu0 %949
        %953 = vset.pattern.permute.xlu0 0
        %954 = vperm.xlu0 %953, %v878
        %v955 = vpop.permute.xlu0 %954
        %958 = vset.pattern.permute.xlu0 0
        %959 = vperm.xlu0 %958, %v881
        %v960 = vpop.permute.xlu0 %959
        %963 = vset.pattern.permute.xlu0 0
        %964 = vperm.xlu0 %963, %v884
        %v965 = vpop.permute.xlu0 %964
        %968 = vset.pattern.permute.xlu0 0
        %969 = vperm.xlu0 %968, %v887
        %v970 = vpop.permute.xlu0 %969
        %973 = vset.pattern.permute.xlu0 0
        %974 = vperm.xlu0 %973, %v890
        %v975 = vpop.permute.xlu0 %974
        %978 = vset.pattern.permute.xlu0 0
        %979 = vperm.xlu0 %978, %v893
        %v980 = vpop.permute.xlu0 %979
        %983 = vset.pattern.permute.xlu0 0
        %984 = vperm.xlu0 %983, %v896
        %v985 = vpop.permute.xlu0 %984
        %988 = vset.pattern.permute.xlu0 0
        %989 = vperm.xlu0 %988, %v899
        %v990 = vpop.permute.xlu0 %989
        %993 = vset.pattern.permute.xlu0 0
        %994 = vperm.xlu0 %993, %v902
        %v995 = vpop.permute.xlu0 %994
        %998 = vset.pattern.permute.xlu0 0
        %999 = vperm.xlu0 %998, %v905
        %v1000 = vpop.permute.xlu0 %999
        %1003 = vset.pattern.permute.xlu0 0
        %1004 = vperm.xlu0 %1003, %v908
        %v1005 = vpop.permute.xlu0 %1004
        %1008 = vset.pattern.permute.xlu0 0
        %1009 = vperm.xlu0 %1008, %v911
        %v1010 = vpop.permute.xlu0 %1009
        %1013 = vset.pattern.permute.xlu0 0
        %1014 = vperm.xlu0 %1013, %v914
        %v1015 = vpop.permute.xlu0 %1014
        %v1017 = vperm.slane %v935, 0
        %v1018 = vadd.f32 %v940, %v1017
        %v1019 = vadd.f32 %v945, %v1017
        %v1020 = vadd.f32 %v950, %v1017
        %v1021 = vadd.f32 %v955, %v1017
        %v1022 = vadd.f32 %v960, %v1017
        %v1023 = vadd.f32 %v965, %v1017
        %v1024 = vadd.f32 %v970, %v1017
        %v1025 = vadd.f32 %v975, %v1017
        %v1026 = vadd.f32 %v980, %v1017
        %v1027 = vadd.f32 %v985, %v1017
        %v1028 = vadd.f32 %v990, %v1017
        %v1029 = vadd.f32 %v995, %v1017
        %v1030 = vadd.f32 %v1000, %v1017
        %v1031 = vadd.f32 %v1005, %v1017
        %v1032 = vadd.f32 %v1010, %v1017
        %v1033 = vadd.f32 %v1015, %v1017
        %vm1034 = vcmp.ge.f32.partialorder %v1018, 0.0
        %vm1035 = vcmp.ge.f32.partialorder %v1019, 0.0
        %vm1036 = vcmp.ge.f32.partialorder %v1020, 0.0
        %vm1037 = vcmp.ge.f32.partialorder %v1021, 0.0
        %vm1038 = vcmp.ge.f32.partialorder %v1022, 0.0
        %vm1039 = vcmp.ge.f32.partialorder %v1023, 0.0
        %vm1040 = vcmp.ge.f32.partialorder %v1024, 0.0
        %vm1041 = vcmp.ge.f32.partialorder %v1025, 0.0
        %vm1042 = vcmp.ge.f32.partialorder %v1026, 0.0
        %vm1043 = vcmp.ge.f32.partialorder %v1027, 0.0
        %vm1044 = vcmp.ge.f32.partialorder %v1028, 0.0
        %vm1045 = vcmp.ge.f32.partialorder %v1029, 0.0
        %vm1046 = vcmp.ge.f32.partialorder %v1030, 0.0
        %vm1047 = vcmp.ge.f32.partialorder %v1031, 0.0
        %vm1048 = vcmp.ge.f32.partialorder %v1032, 0.0
        %vm1049 = vcmp.ge.f32.partialorder %v1033, 0.0
        %v1050 = vmul.f32 %v1018, 0.2
        %v1051 = vmul.f32 %v1019, 0.2
        %v1052 = vmul.f32 %v1020, 0.2
        %v1053 = vmul.f32 %v1021, 0.2
        %v1054 = vmul.f32 %v1022, 0.2
        %v1055 = vmul.f32 %v1023, 0.2
        %v1056 = vmul.f32 %v1024, 0.2
        %v1057 = vmul.f32 %v1025, 0.2
        %v1058 = vmul.f32 %v1026, 0.2
        %v1059 = vmul.f32 %v1027, 0.2
        %v1060 = vmul.f32 %v1028, 0.2
        %v1061 = vmul.f32 %v1029, 0.2
        %v1062 = vmul.f32 %v1030, 0.2
        %v1063 = vmul.f32 %v1031, 0.2
        %v1064 = vmul.f32 %v1032, 0.2
        %v1065 = vmul.f32 %v1033, 0.2
        %v1066 = vsel %vm1034, %v1018, %v1050
        %v1067 = vsel %vm1035, %v1019, %v1051
        %v1068 = vsel %vm1036, %v1020, %v1052
        %v1069 = vsel %vm1037, %v1021, %v1053
        %v1070 = vsel %vm1038, %v1022, %v1054
        %v1071 = vsel %vm1039, %v1023, %v1055
        %v1072 = vsel %vm1040, %v1024, %v1056
        %v1073 = vsel %vm1041, %v1025, %v1057
        %v1074 = vsel %vm1042, %v1026, %v1058
        %v1075 = vsel %vm1043, %v1027, %v1059
        %v1076 = vsel %vm1044, %v1028, %v1060
        %v1077 = vsel %vm1045, %v1029, %v1061
        %v1078 = vsel %vm1046, %v1030, %v1062
        %v1079 = vsel %vm1047, %v1031, %v1063
        %v1080 = vsel %vm1048, %v1032, %v1064
        %v1081 = vsel %vm1049, %v1033, %v1065
        %v1082 = vld [vmem:[%s345] sm:$0xf]
        %v1083 = vld [vmem:[%s345 + $0x4] sm:$0xf]
        %v1084 = vld [vmem:[%s345 + $0x8] sm:$0xf]
        %v1085 = vld [vmem:[%s345 + $0xc] sm:$0xf]
        %v1086 = vld [vmem:[%s345 + $0x10] sm:$0xf]
        %v1087 = vld [vmem:[%s345 + $0x14] sm:$0xf]
        %v1088 = vld [vmem:[%s345 + $0x18] sm:$0xf]
        %v1089 = vld [vmem:[%s345 + $0x1c] sm:$0xf]
        %v1090 = vld [vmem:[%s345 + $0x20] sm:$0xf]
        %v1091 = vld [vmem:[%s345 + $0x24] sm:$0xf]
        %v1092 = vld [vmem:[%s345 + $0x28] sm:$0xf]
        %v1093 = vld [vmem:[%s345 + $0x2c] sm:$0xf]
        %v1094 = vld [vmem:[%s345 + $0x30] sm:$0xf]
        %v1095 = vld [vmem:[%s345 + $0x34] sm:$0xf]
        %v1096 = vld [vmem:[%s345 + $0x38] sm:$0xf]
        %v1097 = vld [vmem:[%s345 + $0x3c] sm:$0xf]
        %v1098 = vunpack.c.l.bf16 %v1082
        %v1099 = vunpack.c.l.bf16 %v1083
        %v1100 = vunpack.c.l.bf16 %v1084
        %v1101 = vunpack.c.l.bf16 %v1085
        %v1102 = vunpack.c.l.bf16 %v1086
        %v1103 = vunpack.c.l.bf16 %v1087
        %v1104 = vunpack.c.l.bf16 %v1088
        %v1105 = vunpack.c.l.bf16 %v1089
        %v1106 = vunpack.c.l.bf16 %v1090
        %v1107 = vunpack.c.l.bf16 %v1091
        %v1108 = vunpack.c.l.bf16 %v1092
        %v1109 = vunpack.c.l.bf16 %v1093
        %v1110 = vunpack.c.l.bf16 %v1094
        %v1111 = vunpack.c.l.bf16 %v1095
        %v1112 = vunpack.c.l.bf16 %v1096
        %v1113 = vunpack.c.l.bf16 %v1097
        %v1114 = vadd.f32 %v1066, %v1098
        %v1115 = vadd.f32 %v1067, %v1099
        %v1116 = vadd.f32 %v1068, %v1100
        %v1117 = vadd.f32 %v1069, %v1101
        %v1118 = vadd.f32 %v1070, %v1102
        %v1119 = vadd.f32 %v1071, %v1103
        %v1120 = vadd.f32 %v1072, %v1104
        %v1121 = vadd.f32 %v1073, %v1105
        %v1122 = vadd.f32 %v1074, %v1106
        %v1123 = vadd.f32 %v1075, %v1107
        %v1124 = vadd.f32 %v1076, %v1108
        %v1125 = vadd.f32 %v1077, %v1109
        %v1126 = vadd.f32 %v1078, %v1110
        %v1127 = vadd.f32 %v1079, %v1111
        %v1128 = vadd.f32 %v1080, %v1112
        %v1129 = vadd.f32 %v1081, %v1113
        %v1130 = vld [vmem:[#allocation3] sm:$0xff]
        %v1131 = vld [vmem:[#allocation3 + $0x8] sm:$0xff]
        %v1132 = vld [vmem:[#allocation3 + $0x10] sm:$0xff]
        %v1133 = vld [vmem:[#allocation3 + $0x18] sm:$0xff]
        %v1134 = vld [vmem:[#allocation3 + $0x20] sm:$0xff]
        %v1135 = vld [vmem:[#allocation3 + $0x28] sm:$0xff]
        %v1136 = vld [vmem:[#allocation3 + $0x30] sm:$0xff]
        %v1137 = vld [vmem:[#allocation3 + $0x38] sm:$0xff]
        %v1138 = vld [vmem:[#allocation3 + $0x40] sm:$0xff]
        %v1139 = vld [vmem:[#allocation3 + $0x48] sm:$0xff]
        %v1140 = vld [vmem:[#allocation3 + $0x50] sm:$0xff]
        %v1141 = vld [vmem:[#allocation3 + $0x58] sm:$0xff]
        %v1142 = vld [vmem:[#allocation3 + $0x60] sm:$0xff]
        %v1143 = vld [vmem:[#allocation3 + $0x68] sm:$0xff]
        %v1144 = vld [vmem:[#allocation3 + $0x70] sm:$0xff]
        %v1145 = vld [vmem:[#allocation3 + $0x78] sm:$0xff]
        %1146 = vmax.xlane.f32.xlu0 %v1114
        %v1147 = vpop.xlane.xlu0 %1146
        %1148 = vmax.xlane.f32.xlu0 %v1115
        %v1149 = vpop.xlane.xlu0 %1148
        %1150 = vmax.xlane.f32.xlu0 %v1116
        %v1151 = vpop.xlane.xlu0 %1150
        %1152 = vmax.xlane.f32.xlu0 %v1117
        %v1153 = vpop.xlane.xlu0 %1152
        %1154 = vmax.xlane.f32.xlu0 %v1118
        %v1155 = vpop.xlane.xlu0 %1154
        %1156 = vmax.xlane.f32.xlu0 %v1119
        %v1157 = vpop.xlane.xlu0 %1156
        %1158 = vmax.xlane.f32.xlu0 %v1120
        %v1159 = vpop.xlane.xlu0 %1158
        %1160 = vmax.xlane.f32.xlu0 %v1121
        %v1161 = vpop.xlane.xlu0 %1160
        %1162 = vmax.xlane.f32.xlu0 %v1122
        %v1163 = vpop.xlane.xlu0 %1162
        %1164 = vmax.xlane.f32.xlu0 %v1123
        %v1165 = vpop.xlane.xlu0 %1164
        %1166 = vmax.xlane.f32.xlu0 %v1124
        %v1167 = vpop.xlane.xlu0 %1166
        %1168 = vmax.xlane.f32.xlu0 %v1125
        %v1169 = vpop.xlane.xlu0 %1168
        %1170 = vmax.xlane.f32.xlu0 %v1126
        %v1171 = vpop.xlane.xlu0 %1170
        %1172 = vmax.xlane.f32.xlu0 %v1127
        %v1173 = vpop.xlane.xlu0 %1172
        %1174 = vmax.xlane.f32.xlu0 %v1128
        %v1175 = vpop.xlane.xlu0 %1174
        %1176 = vmax.xlane.f32.xlu0 %v1129
        %v1177 = vpop.xlane.xlu0 %1176
        %v1178 = vmax.f32 %v1130, %v1147
        %v1179 = vmax.f32 %v1131, %v1149
        %v1180 = vmax.f32 %v1132, %v1151
        %v1181 = vmax.f32 %v1133, %v1153
        %v1182 = vmax.f32 %v1134, %v1155
        %v1183 = vmax.f32 %v1135, %v1157
        %v1184 = vmax.f32 %v1136, %v1159
        %v1185 = vmax.f32 %v1137, %v1161
        %v1186 = vmax.f32 %v1138, %v1163
        %v1187 = vmax.f32 %v1139, %v1165
        %v1188 = vmax.f32 %v1140, %v1167
        %v1189 = vmax.f32 %v1141, %v1169
        %v1190 = vmax.f32 %v1142, %v1171
        %v1191 = vmax.f32 %v1143, %v1173
        %v1192 = vmax.f32 %v1144, %v1175
        %v1193 = vmax.f32 %v1145, %v1177
        %v1194 = vsub.f32 %v1130, %v1178
        %v1195 = vsub.f32 %v1131, %v1179
        %v1196 = vsub.f32 %v1132, %v1180
        %v1197 = vsub.f32 %v1133, %v1181
        %v1198 = vsub.f32 %v1134, %v1182
        %v1199 = vsub.f32 %v1135, %v1183
        %v1200 = vsub.f32 %v1136, %v1184
        %v1201 = vsub.f32 %v1137, %v1185
        %v1202 = vsub.f32 %v1138, %v1186
        %v1203 = vsub.f32 %v1139, %v1187
        %v1204 = vsub.f32 %v1140, %v1188
        %v1205 = vsub.f32 %v1141, %v1189
        %v1206 = vsub.f32 %v1142, %v1190
        %v1207 = vsub.f32 %v1143, %v1191
        %v1208 = vsub.f32 %v1144, %v1192
        %v1209 = vsub.f32 %v1145, %v1193
        %v1210 = vmul.f32 %v1194, 1.442695
        %v1211 = vpow.pop %v1210
        %v1212 = vmul.f32 %v1195, 1.442695
        %v1213 = vpow.pop %v1212
        %v1214 = vmul.f32 %v1196, 1.442695
        %v1215 = vpow.pop %v1214
        %v1216 = vmul.f32 %v1197, 1.442695
        %v1217 = vpow.pop %v1216
        %v1218 = vmul.f32 %v1198, 1.442695
        %v1219 = vpow.pop %v1218
        %v1220 = vmul.f32 %v1199, 1.442695
        %v1221 = vpow.pop %v1220
        %v1222 = vmul.f32 %v1200, 1.442695
        %v1223 = vpow.pop %v1222
        %v1224 = vmul.f32 %v1201, 1.442695
        %v1225 = vpow.pop %v1224
        %v1226 = vmul.f32 %v1202, 1.442695
        %v1227 = vpow.pop %v1226
        %v1228 = vmul.f32 %v1203, 1.442695
        %v1229 = vpow.pop %v1228
        %v1230 = vmul.f32 %v1204, 1.442695
        %v1231 = vpow.pop %v1230
        %v1232 = vmul.f32 %v1205, 1.442695
        %v1233 = vpow.pop %v1232
        %v1234 = vmul.f32 %v1206, 1.442695
        %v1235 = vpow.pop %v1234
        %v1236 = vmul.f32 %v1207, 1.442695
        %v1237 = vpow.pop %v1236
        %v1238 = vmul.f32 %v1208, 1.442695
        %v1239 = vpow.pop %v1238
        %v1240 = vmul.f32 %v1209, 1.442695
        %v1241 = vpow.pop %v1240
        %1243 = vset.pattern.permute.xlu0 0
        %1244 = vperm.xlu0 %1243, %v1178
        %v1245 = vpop.permute.xlu0 %1244
        %1248 = vset.pattern.permute.xlu0 0
        %1249 = vperm.xlu0 %1248, %v1179
        %v1250 = vpop.permute.xlu0 %1249
        %1253 = vset.pattern.permute.xlu0 0
        %1254 = vperm.xlu0 %1253, %v1180
        %v1255 = vpop.permute.xlu0 %1254
        %1258 = vset.pattern.permute.xlu0 0
        %1259 = vperm.xlu0 %1258, %v1181
        %v1260 = vpop.permute.xlu0 %1259
        %1263 = vset.pattern.permute.xlu0 0
        %1264 = vperm.xlu0 %1263, %v1182
        %v1265 = vpop.permute.xlu0 %1264
        %1268 = vset.pattern.permute.xlu0 0
        %1269 = vperm.xlu0 %1268, %v1183
        %v1270 = vpop.permute.xlu0 %1269
        %1273 = vset.pattern.permute.xlu0 0
        %1274 = vperm.xlu0 %1273, %v1184
        %v1275 = vpop.permute.xlu0 %1274
        %1278 = vset.pattern.permute.xlu0 0
        %1279 = vperm.xlu0 %1278, %v1185
        %v1280 = vpop.permute.xlu0 %1279
        %1283 = vset.pattern.permute.xlu0 0
        %1284 = vperm.xlu0 %1283, %v1186
        %v1285 = vpop.permute.xlu0 %1284
        %1288 = vset.pattern.permute.xlu0 0
        %1289 = vperm.xlu0 %1288, %v1187
        %v1290 = vpop.permute.xlu0 %1289
        %1293 = vset.pattern.permute.xlu0 0
        %1294 = vperm.xlu0 %1293, %v1188
        %v1295 = vpop.permute.xlu0 %1294
        %1298 = vset.pattern.permute.xlu0 0
        %1299 = vperm.xlu0 %1298, %v1189
        %v1300 = vpop.permute.xlu0 %1299
        %1303 = vset.pattern.permute.xlu0 0
        %1304 = vperm.xlu0 %1303, %v1190
        %v1305 = vpop.permute.xlu0 %1304
        %1308 = vset.pattern.permute.xlu0 0
        %1309 = vperm.xlu0 %1308, %v1191
        %v1310 = vpop.permute.xlu0 %1309
        %1313 = vset.pattern.permute.xlu0 0
        %1314 = vperm.xlu0 %1313, %v1192
        %v1315 = vpop.permute.xlu0 %1314
        %1318 = vset.pattern.permute.xlu0 0
        %1319 = vperm.xlu0 %1318, %v1193
        %v1320 = vpop.permute.xlu0 %1319
        %v1322 = vsub.f32 %v1114, %v1245
        %v1323 = vsub.f32 %v1115, %v1250
        %v1324 = vsub.f32 %v1116, %v1255
        %v1325 = vsub.f32 %v1117, %v1260
        %v1326 = vsub.f32 %v1118, %v1265
        %v1327 = vsub.f32 %v1119, %v1270
        %v1328 = vsub.f32 %v1120, %v1275
        %v1329 = vsub.f32 %v1121, %v1280
        %v1330 = vsub.f32 %v1122, %v1285
        %v1331 = vsub.f32 %v1123, %v1290
        %v1332 = vsub.f32 %v1124, %v1295
        %v1333 = vsub.f32 %v1125, %v1300
        %v1334 = vsub.f32 %v1126, %v1305
        %v1335 = vsub.f32 %v1127, %v1310
        %v1336 = vsub.f32 %v1128, %v1315
        %v1337 = vsub.f32 %v1129, %v1320
        %v1338 = vmul.f32 %v1322, 1.442695
        %v1339 = vpow.pop %v1338
        %v1340 = vmul.f32 %v1323, 1.442695
        %v1341 = vpow.pop %v1340
        %v1342 = vmul.f32 %v1324, 1.442695
        %v1343 = vpow.pop %v1342
        %v1344 = vmul.f32 %v1325, 1.442695
        %v1345 = vpow.pop %v1344
        %v1346 = vmul.f32 %v1326, 1.442695
        %v1347 = vpow.pop %v1346
        %v1348 = vmul.f32 %v1327, 1.442695
        %v1349 = vpow.pop %v1348
        %v1350 = vmul.f32 %v1328, 1.442695
        %v1351 = vpow.pop %v1350
        %v1352 = vmul.f32 %v1329, 1.442695
        %v1353 = vpow.pop %v1352
        %v1354 = vmul.f32 %v1330, 1.442695
        %v1355 = vpow.pop %v1354
        %v1356 = vmul.f32 %v1331, 1.442695
        %v1357 = vpow.pop %v1356
        %v1358 = vmul.f32 %v1332, 1.442695
        %v1359 = vpow.pop %v1358
        %v1360 = vmul.f32 %v1333, 1.442695
        %v1361 = vpow.pop %v1360
        %v1362 = vmul.f32 %v1334, 1.442695
        %v1363 = vpow.pop %v1362
        %v1364 = vmul.f32 %v1335, 1.442695
        %v1365 = vpow.pop %v1364
        %v1366 = vmul.f32 %v1336, 1.442695
        %v1367 = vpow.pop %v1366
        %v1368 = vmul.f32 %v1337, 1.442695
        %v1369 = vpow.pop %v1368
        %v1370 = vld [vmem:[#allocation4] sm:$0xff]
        %v1371 = vld [vmem:[#allocation4 + $0x8] sm:$0xff]
        %v1372 = vld [vmem:[#allocation4 + $0x10] sm:$0xff]
        %v1373 = vld [vmem:[#allocation4 + $0x18] sm:$0xff]
        %v1374 = vld [vmem:[#allocation4 + $0x20] sm:$0xff]
        %v1375 = vld [vmem:[#allocation4 + $0x28] sm:$0xff]
        %v1376 = vld [vmem:[#allocation4 + $0x30] sm:$0xff]
        %v1377 = vld [vmem:[#allocation4 + $0x38] sm:$0xff]
        %v1378 = vld [vmem:[#allocation4 + $0x40] sm:$0xff]
        %v1379 = vld [vmem:[#allocation4 + $0x48] sm:$0xff]
        %v1380 = vld [vmem:[#allocation4 + $0x50] sm:$0xff]
        %v1381 = vld [vmem:[#allocation4 + $0x58] sm:$0xff]
        %v1382 = vld [vmem:[#allocation4 + $0x60] sm:$0xff]
        %v1383 = vld [vmem:[#allocation4 + $0x68] sm:$0xff]
        %v1384 = vld [vmem:[#allocation4 + $0x70] sm:$0xff]
        %v1385 = vld [vmem:[#allocation4 + $0x78] sm:$0xff]
        %v1386 = vmul.f32 %v1211, %v1370
        %v1387 = vmul.f32 %v1213, %v1371
        %v1388 = vmul.f32 %v1215, %v1372
        %v1389 = vmul.f32 %v1217, %v1373
        %v1390 = vmul.f32 %v1219, %v1374
        %v1391 = vmul.f32 %v1221, %v1375
        %v1392 = vmul.f32 %v1223, %v1376
        %v1393 = vmul.f32 %v1225, %v1377
        %v1394 = vmul.f32 %v1227, %v1378
        %v1395 = vmul.f32 %v1229, %v1379
        %v1396 = vmul.f32 %v1231, %v1380
        %v1397 = vmul.f32 %v1233, %v1381
        %v1398 = vmul.f32 %v1235, %v1382
        %v1399 = vmul.f32 %v1237, %v1383
        %v1400 = vmul.f32 %v1239, %v1384
        %v1401 = vmul.f32 %v1241, %v1385
        %1402 = vadd.xlane.f32.xlu0 %v1339
        %v1403 = vpop.xlane.xlu0 %1402
        %1404 = vadd.xlane.f32.xlu0 %v1341
        %v1405 = vpop.xlane.xlu0 %1404
        %1406 = vadd.xlane.f32.xlu0 %v1343
        %v1407 = vpop.xlane.xlu0 %1406
        %1408 = vadd.xlane.f32.xlu0 %v1345
        %v1409 = vpop.xlane.xlu0 %1408
        %1410 = vadd.xlane.f32.xlu0 %v1347
        %v1411 = vpop.xlane.xlu0 %1410
        %1412 = vadd.xlane.f32.xlu0 %v1349
        %v1413 = vpop.xlane.xlu0 %1412
        %1414 = vadd.xlane.f32.xlu0 %v1351
        %v1415 = vpop.xlane.xlu0 %1414
        %1416 = vadd.xlane.f32.xlu0 %v1353
        %v1417 = vpop.xlane.xlu0 %1416
        %1418 = vadd.xlane.f32.xlu0 %v1355
        %v1419 = vpop.xlane.xlu0 %1418
        %1420 = vadd.xlane.f32.xlu0 %v1357
        %v1421 = vpop.xlane.xlu0 %1420
        %1422 = vadd.xlane.f32.xlu0 %v1359
        %v1423 = vpop.xlane.xlu0 %1422
        %1424 = vadd.xlane.f32.xlu0 %v1361
        %v1425 = vpop.xlane.xlu0 %1424
        %1426 = vadd.xlane.f32.xlu0 %v1363
        %v1427 = vpop.xlane.xlu0 %1426
        %1428 = vadd.xlane.f32.xlu0 %v1365
        %v1429 = vpop.xlane.xlu0 %1428
        %1430 = vadd.xlane.f32.xlu0 %v1367
        %v1431 = vpop.xlane.xlu0 %1430
        %1432 = vadd.xlane.f32.xlu0 %v1369
        %v1433 = vpop.xlane.xlu0 %1432
        %v1434 = vadd.f32 %v1386, %v1403
        %v1435 = vadd.f32 %v1387, %v1405
        %v1436 = vadd.f32 %v1388, %v1407
        %v1437 = vadd.f32 %v1389, %v1409
        %v1438 = vadd.f32 %v1390, %v1411
        %v1439 = vadd.f32 %v1391, %v1413
        %v1440 = vadd.f32 %v1392, %v1415
        %v1441 = vadd.f32 %v1393, %v1417
        %v1442 = vadd.f32 %v1394, %v1419
        %v1443 = vadd.f32 %v1395, %v1421
        %v1444 = vadd.f32 %v1396, %v1423
        %v1445 = vadd.f32 %v1397, %v1425
        %v1446 = vadd.f32 %v1398, %v1427
        %v1447 = vadd.f32 %v1399, %v1429
        %v1448 = vadd.f32 %v1400, %v1431
        %v1449 = vadd.f32 %v1401, %v1433
        %vm1450 = vcmask 7168
        %1451 = vst.msk [vmem:[#allocation4] sm:$0xff] %vm1450, %v1434
        %1452 = vst.msk [vmem:[#allocation4 + $0x8] sm:$0xff] %vm1450, %v1435
        %1453 = vst.msk [vmem:[#allocation4 + $0x10] sm:$0xff] %vm1450, %v1436
        %1454 = vst.msk [vmem:[#allocation4 + $0x18] sm:$0xff] %vm1450, %v1437
        %1455 = vst.msk [vmem:[#allocation4 + $0x20] sm:$0xff] %vm1450, %v1438
        %1456 = vst.msk [vmem:[#allocation4 + $0x28] sm:$0xff] %vm1450, %v1439
        %1457 = vst.msk [vmem:[#allocation4 + $0x30] sm:$0xff] %vm1450, %v1440
        %1458 = vst.msk [vmem:[#allocation4 + $0x38] sm:$0xff] %vm1450, %v1441
        %1459 = vst.msk [vmem:[#allocation4 + $0x40] sm:$0xff] %vm1450, %v1442
        %1460 = vst.msk [vmem:[#allocation4 + $0x48] sm:$0xff] %vm1450, %v1443
        %1461 = vst.msk [vmem:[#allocation4 + $0x50] sm:$0xff] %vm1450, %v1444
        %1462 = vst.msk [vmem:[#allocation4 + $0x58] sm:$0xff] %vm1450, %v1445
        %1463 = vst.msk [vmem:[#allocation4 + $0x60] sm:$0xff] %vm1450, %v1446
        %1464 = vst.msk [vmem:[#allocation4 + $0x68] sm:$0xff] %vm1450, %v1447
        %1465 = vst.msk [vmem:[#allocation4 + $0x70] sm:$0xff] %vm1450, %v1448
        %1466 = vst.msk [vmem:[#allocation4 + $0x78] sm:$0xff] %vm1450, %v1449
        %v1467 = vld [vmem:[#allocation5] sm:$0xff]
        %v1468 = vld [vmem:[#allocation5 + $0x8] sm:$0xff]
        %v1469 = vld [vmem:[#allocation5 + $0x10] sm:$0xff]
        %v1470 = vld [vmem:[#allocation5 + $0x18] sm:$0xff]
        %v1471 = vld [vmem:[#allocation5 + $0x20] sm:$0xff]
        %v1472 = vld [vmem:[#allocation5 + $0x28] sm:$0xff]
        %v1473 = vld [vmem:[#allocation5 + $0x30] sm:$0xff]
        %v1474 = vld [vmem:[#allocation5 + $0x38] sm:$0xff]
        %v1475 = vld [vmem:[#allocation5 + $0x40] sm:$0xff]
        %v1476 = vld [vmem:[#allocation5 + $0x48] sm:$0xff]
        %v1477 = vld [vmem:[#allocation5 + $0x50] sm:$0xff]
        %v1478 = vld [vmem:[#allocation5 + $0x58] sm:$0xff]
        %v1479 = vld [vmem:[#allocation5 + $0x60] sm:$0xff]
        %v1480 = vld [vmem:[#allocation5 + $0x68] sm:$0xff]
        %v1481 = vld [vmem:[#allocation5 + $0x70] sm:$0xff]
        %v1482 = vld [vmem:[#allocation5 + $0x78] sm:$0xff]
        %1484 = vset.pattern.permute.xlu0 0
        %1485 = vperm.xlu0 %1484, %v1211
        %v1486 = vpop.permute.xlu0 %1485
        %1489 = vset.pattern.permute.xlu0 0
        %1490 = vperm.xlu0 %1489, %v1213
        %v1491 = vpop.permute.xlu0 %1490
        %1494 = vset.pattern.permute.xlu0 0
        %1495 = vperm.xlu0 %1494, %v1215
        %v1496 = vpop.permute.xlu0 %1495
        %1499 = vset.pattern.permute.xlu0 0
        %1500 = vperm.xlu0 %1499, %v1217
        %v1501 = vpop.permute.xlu0 %1500
        %1504 = vset.pattern.permute.xlu0 0
        %1505 = vperm.xlu0 %1504, %v1219
        %v1506 = vpop.permute.xlu0 %1505
        %1509 = vset.pattern.permute.xlu0 0
        %1510 = vperm.xlu0 %1509, %v1221
        %v1511 = vpop.permute.xlu0 %1510
        %1514 = vset.pattern.permute.xlu0 0
        %1515 = vperm.xlu0 %1514, %v1223
        %v1516 = vpop.permute.xlu0 %1515
        %1519 = vset.pattern.permute.xlu0 0
        %1520 = vperm.xlu0 %1519, %v1225
        %v1521 = vpop.permute.xlu0 %1520
        %1524 = vset.pattern.permute.xlu0 0
        %1525 = vperm.xlu0 %1524, %v1227
        %v1526 = vpop.permute.xlu0 %1525
        %1529 = vset.pattern.permute.xlu0 0
        %1530 = vperm.xlu0 %1529, %v1229
        %v1531 = vpop.permute.xlu0 %1530
        %1534 = vset.pattern.permute.xlu0 0
        %1535 = vperm.xlu0 %1534, %v1231
        %v1536 = vpop.permute.xlu0 %1535
        %1539 = vset.pattern.permute.xlu0 0
        %1540 = vperm.xlu0 %1539, %v1233
        %v1541 = vpop.permute.xlu0 %1540
        %1544 = vset.pattern.permute.xlu0 0
        %1545 = vperm.xlu0 %1544, %v1235
        %v1546 = vpop.permute.xlu0 %1545
        %1549 = vset.pattern.permute.xlu0 0
        %1550 = vperm.xlu0 %1549, %v1237
        %v1551 = vpop.permute.xlu0 %1550
        %1554 = vset.pattern.permute.xlu0 0
        %1555 = vperm.xlu0 %1554, %v1239
        %v1556 = vpop.permute.xlu0 %1555
        %1559 = vset.pattern.permute.xlu0 0
        %1560 = vperm.xlu0 %1559, %v1241
        %v1561 = vpop.permute.xlu0 %1560
        %v1563 = vmul.f32 %v1486, %v1467
        %v1564 = vmul.f32 %v1491, %v1468
        %v1565 = vmul.f32 %v1496, %v1469
        %v1566 = vmul.f32 %v1501, %v1470
        %v1567 = vmul.f32 %v1506, %v1471
        %v1568 = vmul.f32 %v1511, %v1472
        %v1569 = vmul.f32 %v1516, %v1473
        %v1570 = vmul.f32 %v1521, %v1474
        %v1571 = vmul.f32 %v1526, %v1475
        %v1572 = vmul.f32 %v1531, %v1476
        %v1573 = vmul.f32 %v1536, %v1477
        %v1574 = vmul.f32 %v1541, %v1478
        %v1575 = vmul.f32 %v1546, %v1479
        %v1576 = vmul.f32 %v1551, %v1480
        %v1577 = vmul.f32 %v1556, %v1481
        %v1578 = vmul.f32 %v1561, %v1482
        %v1579 = vpack.c.bf16 %v1341, %v1339
        %v1580 = vpack.c.bf16 %v1345, %v1343
        %v1581 = vpack.c.bf16 %v1349, %v1347
        %v1582 = vpack.c.bf16 %v1353, %v1351
        %v1583 = vpack.c.bf16 %v1357, %v1355
        %v1584 = vpack.c.bf16 %v1361, %v1359
        %v1585 = vpack.c.bf16 %v1365, %v1363
        %v1586 = vpack.c.bf16 %v1369, %v1367
        %v1587 = vpack.c.bf16 %v798, %v796
        %v1588 = vpack.c.bf16 %v803, %v801
        %v1589 = vpack.c.bf16 %v808, %v806
        %v1590 = vpack.c.bf16 %v813, %v811
        %v1591 = vpack.c.bf16 %v818, %v816
        %v1592 = vpack.c.bf16 %v823, %v821
        %v1593 = vpack.c.bf16 %v828, %v826
        %v1594 = vpack.c.bf16 %v833, %v831
        %1595 = vmatpush.bf16.msra.mxu0 %v1594
        %1596 = vmatpush.bf16.msra.mxu0 %v1593
        %1597 = vmatpush.bf16.msra.mxu0 %v1592
        %1598 = vmatpush.bf16.msra.mxu0 %v1591
        %1599 = vmatpush.bf16.msra.mxu0 %v1590
        %1600 = vmatpush.bf16.msra.mxu0 %v1589
        %1601 = vmatpush.bf16.msra.mxu0 %v1588
        %1602 = vmatpush.bf16.msra.mxu0 %v1587
        %1603 = vmatmul.bf16.gmra.mxu0 %v1579
        %v1604 = vpop.f32.mrf.mxu0
        %v1605 = vadd.f32 0.0, %v1604
        %v1606 = vpop.f32.mrf.mxu0
        %v1607 = vadd.f32 0.0, %v1606
        %1608 = vmatmul.bf16.gmra.mxu0 %v1580
        %v1609 = vpop.f32.mrf.mxu0
        %v1610 = vadd.f32 0.0, %v1609
        %v1611 = vpop.f32.mrf.mxu0
        %v1612 = vadd.f32 0.0, %v1611
        %1613 = vmatmul.bf16.gmra.mxu0 %v1581
        %v1614 = vpop.f32.mrf.mxu0
        %v1615 = vadd.f32 0.0, %v1614
        %v1616 = vpop.f32.mrf.mxu0
        %v1617 = vadd.f32 0.0, %v1616
        %1618 = vmatmul.bf16.gmra.mxu0 %v1582
        %v1619 = vpop.f32.mrf.mxu0
        %v1620 = vadd.f32 0.0, %v1619
        %v1621 = vpop.f32.mrf.mxu0
        %v1622 = vadd.f32 0.0, %v1621
        %1623 = vmatmul.bf16.gmra.mxu0 %v1583
        %v1624 = vpop.f32.mrf.mxu0
        %v1625 = vadd.f32 0.0, %v1624
        %v1626 = vpop.f32.mrf.mxu0
        %v1627 = vadd.f32 0.0, %v1626
        %1628 = vmatmul.bf16.gmra.mxu0 %v1584
        %v1629 = vpop.f32.mrf.mxu0
        %v1630 = vadd.f32 0.0, %v1629
        %v1631 = vpop.f32.mrf.mxu0
        %v1632 = vadd.f32 0.0, %v1631
        %1633 = vmatmul.bf16.gmra.mxu0 %v1585
        %v1634 = vpop.f32.mrf.mxu0
        %v1635 = vadd.f32 0.0, %v1634
        %v1636 = vpop.f32.mrf.mxu0
        %v1637 = vadd.f32 0.0, %v1636
        %1638 = vmatmul.bf16.gmra.mxu0 %v1586
        %v1639 = vpop.f32.mrf.mxu0
        %v1640 = vadd.f32 0.0, %v1639
        %v1641 = vpop.f32.mrf.mxu0
        %v1642 = vadd.f32 0.0, %v1641
        %1643 = vdwg.mxu0
        %v1644 = vadd.f32 %v1563, %v1605
        %v1645 = vadd.f32 %v1564, %v1607
        %v1646 = vadd.f32 %v1565, %v1610
        %v1647 = vadd.f32 %v1566, %v1612
        %v1648 = vadd.f32 %v1567, %v1615
        %v1649 = vadd.f32 %v1568, %v1617
        %v1650 = vadd.f32 %v1569, %v1620
        %v1651 = vadd.f32 %v1570, %v1622
        %v1652 = vadd.f32 %v1571, %v1625
        %v1653 = vadd.f32 %v1572, %v1627
        %v1654 = vadd.f32 %v1573, %v1630
        %v1655 = vadd.f32 %v1574, %v1632
        %v1656 = vadd.f32 %v1575, %v1635
        %v1657 = vadd.f32 %v1576, %v1637
        %v1658 = vadd.f32 %v1577, %v1640
        %v1659 = vadd.f32 %v1578, %v1642
        %1660 = vst [vmem:[#allocation5] sm:$0xff] %v1644
        %1661 = vst [vmem:[#allocation5 + $0x8] sm:$0xff] %v1645
        %1662 = vst [vmem:[#allocation5 + $0x10] sm:$0xff] %v1646
        %1663 = vst [vmem:[#allocation5 + $0x18] sm:$0xff] %v1647
        %1664 = vst [vmem:[#allocation5 + $0x20] sm:$0xff] %v1648
        %1665 = vst [vmem:[#allocation5 + $0x28] sm:$0xff] %v1649
        %1666 = vst [vmem:[#allocation5 + $0x30] sm:$0xff] %v1650
        %1667 = vst [vmem:[#allocation5 + $0x38] sm:$0xff] %v1651
        %1668 = vst [vmem:[#allocation5 + $0x40] sm:$0xff] %v1652
        %1669 = vst [vmem:[#allocation5 + $0x48] sm:$0xff] %v1653
        %1670 = vst [vmem:[#allocation5 + $0x50] sm:$0xff] %v1654
        %1671 = vst [vmem:[#allocation5 + $0x58] sm:$0xff] %v1655
        %1672 = vst [vmem:[#allocation5 + $0x60] sm:$0xff] %v1656
        %1673 = vst [vmem:[#allocation5 + $0x68] sm:$0xff] %v1657
        %1674 = vst [vmem:[#allocation5 + $0x70] sm:$0xff] %v1658
        %1675 = vst [vmem:[#allocation5 + $0x78] sm:$0xff] %v1659
        %1676 = vst.msk [vmem:[#allocation3] sm:$0xff] %vm1450, %v1178
        %1677 = vst.msk [vmem:[#allocation3 + $0x8] sm:$0xff] %vm1450, %v1179
        %1678 = vst.msk [vmem:[#allocation3 + $0x10] sm:$0xff] %vm1450, %v1180
        %1679 = vst.msk [vmem:[#allocation3 + $0x18] sm:$0xff] %vm1450, %v1181
        %1680 = vst.msk [vmem:[#allocation3 + $0x20] sm:$0xff] %vm1450, %v1182
        %1681 = vst.msk [vmem:[#allocation3 + $0x28] sm:$0xff] %vm1450, %v1183
        %1682 = vst.msk [vmem:[#allocation3 + $0x30] sm:$0xff] %vm1450, %v1184
        %1683 = vst.msk [vmem:[#allocation3 + $0x38] sm:$0xff] %vm1450, %v1185
        %1684 = vst.msk [vmem:[#allocation3 + $0x40] sm:$0xff] %vm1450, %v1186
        %1685 = vst.msk [vmem:[#allocation3 + $0x48] sm:$0xff] %vm1450, %v1187
        %1686 = vst.msk [vmem:[#allocation3 + $0x50] sm:$0xff] %vm1450, %v1188
        %1687 = vst.msk [vmem:[#allocation3 + $0x58] sm:$0xff] %vm1450, %v1189
        %1688 = vst.msk [vmem:[#allocation3 + $0x60] sm:$0xff] %vm1450, %v1190
        %1689 = vst.msk [vmem:[#allocation3 + $0x68] sm:$0xff] %vm1450, %v1191
        %1690 = vst.msk [vmem:[#allocation3 + $0x70] sm:$0xff] %vm1450, %v1192
        %1691 = vst.msk [vmem:[#allocation3 + $0x78] sm:$0xff] %vm1450, %v1193
        %p1692 = scmp.eq.s32.totalorder %s30, 1
        // Predicated region
        $region65: #{tpu_custom_call.1} parent=47 // pred_check
          %p1693 = pneg %p1692
        $region66: #{tpu_custom_call.1} parent=47 // pred_check_branch
          %1695 = sbr.rel (%p1693) target = $region68
        $region67: #{tpu_custom_call.1} parent=47 // pred_region
          %v1696 = vld [vmem:[#allocation4] sm:$0xff]
          %v1697 = vld [vmem:[#allocation4 + $0x8] sm:$0xff]
          %v1698 = vld [vmem:[#allocation4 + $0x10] sm:$0xff]
          %v1699 = vld [vmem:[#allocation4 + $0x18] sm:$0xff]
          %v1700 = vld [vmem:[#allocation4 + $0x20] sm:$0xff]
          %v1701 = vld [vmem:[#allocation4 + $0x28] sm:$0xff]
          %v1702 = vld [vmem:[#allocation4 + $0x30] sm:$0xff]
          %v1703 = vld [vmem:[#allocation4 + $0x38] sm:$0xff]
          %v1704 = vld [vmem:[#allocation4 + $0x40] sm:$0xff]
          %v1705 = vld [vmem:[#allocation4 + $0x48] sm:$0xff]
          %v1706 = vld [vmem:[#allocation4 + $0x50] sm:$0xff]
          %v1707 = vld [vmem:[#allocation4 + $0x58] sm:$0xff]
          %v1708 = vld [vmem:[#allocation4 + $0x60] sm:$0xff]
          %v1709 = vld [vmem:[#allocation4 + $0x68] sm:$0xff]
          %v1710 = vld [vmem:[#allocation4 + $0x70] sm:$0xff]
          %v1711 = vld [vmem:[#allocation4 + $0x78] sm:$0xff]
          %v1712 = vrcp.pop %v1696
          %v1713 = vrcp.pop %v1697
          %v1714 = vrcp.pop %v1698
          %v1715 = vrcp.pop %v1699
          %v1716 = vrcp.pop %v1700
          %v1717 = vrcp.pop %v1701
          %v1718 = vrcp.pop %v1702
          %v1719 = vrcp.pop %v1703
          %v1720 = vrcp.pop %v1704
          %v1721 = vrcp.pop %v1705
          %v1722 = vrcp.pop %v1706
          %v1723 = vrcp.pop %v1707
          %v1724 = vrcp.pop %v1708
          %v1725 = vrcp.pop %v1709
          %v1726 = vrcp.pop %v1710
          %v1727 = vrcp.pop %v1711
          %v1728 = vld [vmem:[#allocation5] sm:$0xff]
          %v1729 = vld [vmem:[#allocation5 + $0x8] sm:$0xff]
          %v1730 = vld [vmem:[#allocation5 + $0x10] sm:$0xff]
          %v1731 = vld [vmem:[#allocation5 + $0x18] sm:$0xff]
          %v1732 = vld [vmem:[#allocation5 + $0x20] sm:$0xff]
          %v1733 = vld [vmem:[#allocation5 + $0x28] sm:$0xff]
          %v1734 = vld [vmem:[#allocation5 + $0x30] sm:$0xff]
          %v1735 = vld [vmem:[#allocation5 + $0x38] sm:$0xff]
          %v1736 = vld [vmem:[#allocation5 + $0x40] sm:$0xff]
          %v1737 = vld [vmem:[#allocation5 + $0x48] sm:$0xff]
          %v1738 = vld [vmem:[#allocation5 + $0x50] sm:$0xff]
          %v1739 = vld [vmem:[#allocation5 + $0x58] sm:$0xff]
          %v1740 = vld [vmem:[#allocation5 + $0x60] sm:$0xff]
          %v1741 = vld [vmem:[#allocation5 + $0x68] sm:$0xff]
          %v1742 = vld [vmem:[#allocation5 + $0x70] sm:$0xff]
          %v1743 = vld [vmem:[#allocation5 + $0x78] sm:$0xff]
          %1745 = vset.pattern.permute.xlu0 0
          %1746 = vperm.xlu0 %1745, %v1712
          %v1747 = vpop.permute.xlu0 %1746
          %1750 = vset.pattern.permute.xlu0 0
          %1751 = vperm.xlu0 %1750, %v1713
          %v1752 = vpop.permute.xlu0 %1751
          %1755 = vset.pattern.permute.xlu0 0
          %1756 = vperm.xlu0 %1755, %v1714
          %v1757 = vpop.permute.xlu0 %1756
          %1760 = vset.pattern.permute.xlu0 0
          %1761 = vperm.xlu0 %1760, %v1715
          %v1762 = vpop.permute.xlu0 %1761
          %1765 = vset.pattern.permute.xlu0 0
          %1766 = vperm.xlu0 %1765, %v1716
          %v1767 = vpop.permute.xlu0 %1766
          %1770 = vset.pattern.permute.xlu0 0
          %1771 = vperm.xlu0 %1770, %v1717
          %v1772 = vpop.permute.xlu0 %1771
          %1775 = vset.pattern.permute.xlu0 0
          %1776 = vperm.xlu0 %1775, %v1718
          %v1777 = vpop.permute.xlu0 %1776
          %1780 = vset.pattern.permute.xlu0 0
          %1781 = vperm.xlu0 %1780, %v1719
          %v1782 = vpop.permute.xlu0 %1781
          %1785 = vset.pattern.permute.xlu0 0
          %1786 = vperm.xlu0 %1785, %v1720
          %v1787 = vpop.permute.xlu0 %1786
          %1790 = vset.pattern.permute.xlu0 0
          %1791 = vperm.xlu0 %1790, %v1721
          %v1792 = vpop.permute.xlu0 %1791
          %1795 = vset.pattern.permute.xlu0 0
          %1796 = vperm.xlu0 %1795, %v1722
          %v1797 = vpop.permute.xlu0 %1796
          %1800 = vset.pattern.permute.xlu0 0
          %1801 = vperm.xlu0 %1800, %v1723
          %v1802 = vpop.permute.xlu0 %1801
          %1805 = vset.pattern.permute.xlu0 0
          %1806 = vperm.xlu0 %1805, %v1724
          %v1807 = vpop.permute.xlu0 %1806
          %1810 = vset.pattern.permute.xlu0 0
          %1811 = vperm.xlu0 %1810, %v1725
          %v1812 = vpop.permute.xlu0 %1811
          %1815 = vset.pattern.permute.xlu0 0
          %1816 = vperm.xlu0 %1815, %v1726
          %v1817 = vpop.permute.xlu0 %1816
          %1820 = vset.pattern.permute.xlu0 0
          %1821 = vperm.xlu0 %1820, %v1727
          %v1822 = vpop.permute.xlu0 %1821
          %v1824 = vmul.f32 %v1728, %v1747
          %v1825 = vmul.f32 %v1729, %v1752
          %v1826 = vmul.f32 %v1730, %v1757
          %v1827 = vmul.f32 %v1731, %v1762
          %v1828 = vmul.f32 %v1732, %v1767
          %v1829 = vmul.f32 %v1733, %v1772
          %v1830 = vmul.f32 %v1734, %v1777
          %v1831 = vmul.f32 %v1735, %v1782
          %v1832 = vmul.f32 %v1736, %v1787
          %v1833 = vmul.f32 %v1737, %v1792
          %v1834 = vmul.f32 %v1738, %v1797
          %v1835 = vmul.f32 %v1739, %v1802
          %v1836 = vmul.f32 %v1740, %v1807
          %v1837 = vmul.f32 %v1741, %v1812
          %v1838 = vmul.f32 %v1742, %v1817
          %v1839 = vmul.f32 %v1743, %v1822
          %v1840 = vld [vmem:[%s5] sm:$0x1]
          %v1842 = vperm.slane %v1840, 0
          %v1844 = vadd.f32 %v1824, %v1842
          %v1845 = vadd.f32 %v1825, %v1842
          %v1846 = vadd.f32 %v1826, %v1842
          %v1847 = vadd.f32 %v1827, %v1842
          %v1848 = vadd.f32 %v1828, %v1842
          %v1849 = vadd.f32 %v1829, %v1842
          %v1850 = vadd.f32 %v1830, %v1842
          %v1851 = vadd.f32 %v1831, %v1842
          %v1852 = vadd.f32 %v1832, %v1842
          %v1853 = vadd.f32 %v1833, %v1842
          %v1854 = vadd.f32 %v1834, %v1842
          %v1855 = vadd.f32 %v1835, %v1842
          %v1856 = vadd.f32 %v1836, %v1842
          %v1857 = vadd.f32 %v1837, %v1842
          %v1858 = vadd.f32 %v1838, %v1842
          %v1859 = vadd.f32 %v1839, %v1842
          %v1860 = vtanh.pop %v1844
          %v1861 = vtanh.pop %v1845
          %v1862 = vtanh.pop %v1846
          %v1863 = vtanh.pop %v1847
          %v1864 = vtanh.pop %v1848
          %v1865 = vtanh.pop %v1849
          %v1866 = vtanh.pop %v1850
          %v1867 = vtanh.pop %v1851
          %v1868 = vtanh.pop %v1852
          %v1869 = vtanh.pop %v1853
          %v1870 = vtanh.pop %v1854
          %v1871 = vtanh.pop %v1855
          %v1872 = vtanh.pop %v1856
          %v1873 = vtanh.pop %v1857
          %v1874 = vtanh.pop %v1858
          %v1875 = vtanh.pop %v1859
          %1876 = vst [vmem:[%s386] sm:$0xff] %v1860
          %1877 = vst [vmem:[%s386 + $0x8] sm:$0xff] %v1861
          %1878 = vst [vmem:[%s386 + $0x10] sm:$0xff] %v1862
          %1879 = vst [vmem:[%s386 + $0x18] sm:$0xff] %v1863
          %1880 = vst [vmem:[%s386 + $0x20] sm:$0xff] %v1864
          %1881 = vst [vmem:[%s386 + $0x28] sm:$0xff] %v1865
          %1882 = vst [vmem:[%s386 + $0x30] sm:$0xff] %v1866
          %1883 = vst [vmem:[%s386 + $0x38] sm:$0xff] %v1867
          %1884 = vst [vmem:[%s386 + $0x40] sm:$0xff] %v1868
          %1885 = vst [vmem:[%s386 + $0x48] sm:$0xff] %v1869
          %1886 = vst [vmem:[%s386 + $0x50] sm:$0xff] %v1870
          %1887 = vst [vmem:[%s386 + $0x58] sm:$0xff] %v1871
          %1888 = vst [vmem:[%s386 + $0x60] sm:$0xff] %v1872
          %1889 = vst [vmem:[%s386 + $0x68] sm:$0xff] %v1873
          %1890 = vst [vmem:[%s386 + $0x70] sm:$0xff] %v1874
          %1891 = vst [vmem:[%s386 + $0x78] sm:$0xff] %v1875
        $region68: #{tpu_custom_call.1} parent=47 // pred_fallthru
          _
        %s1892 = sand.u32 %s209, 1
        %s1893 = scalar_lea.sflag [#allocation8], %s1892
        %s1894 = sand.u32 %s209, 1
        %s1895 = smul.addr %s1894, 128
        %s1896 = scalar_lea.vmem [#allocation12], %s1895
        // Predicated region
        $region69: #{tpu_custom_call.1} parent=47 // pred_check
          %p1897 = pneg %p219
        $region70: #{tpu_custom_call.1} parent=47 // pred_check_branch
          %1899 = sbr.rel (%p1897) target = $region72
        $region71: #{tpu_custom_call.1} parent=47 // pred_region
          %s1900 = smul.u32 16, %s29
          %1902 = vsyncadd %s1893, 0
          %s1903 = smul.addr %s1900, 8
          %s1904 = scalar_lea.hbm %s7, %s1903
          %s1905 = sshll.u32 %s1896, 4
          %s1906 = int_to_ptr.vmem [resolvable:$true] %s1905
          %s1907 = sshll.u32 %s1904, 4
          %s1908 = int_to_ptr.hbm [resolvable:$true] %s1907
          %1913 = dma.vmem_to_hbm [thread:$0]  %s1906, 2048, %s1908, %s1893, 128, 128, 8
        $region72: #{tpu_custom_call.1} parent=47 // pred_fallthru
          _
      $region48: #{tpu_custom_call.1} parent=5 // pred_fallthru
        _
      %p1914 = scmp.le.s32.totalorder 2, %s20
      // Predicated region
      $region73: #{tpu_custom_call.1} parent=5 // pred_check
        %p1915 = pneg %p1914
      $region74: #{tpu_custom_call.1} parent=5 // pred_check_branch
        %1917 = sbr.rel (%p1915) target = $region76
      $region75: #{tpu_custom_call.1} parent=5 // pred_region
        %s1918 = ssub.s32 %s20, 2
        // Predicated region
        $region77: #{tpu_custom_call.1} parent=75 // pred_check
          %p1919 = pneg %p225
        $region78: #{tpu_custom_call.1} parent=75 // pred_check_branch
          %1921 = sbr.rel (%p1919) target = $region80
        $region79: #{tpu_custom_call.1} parent=75 // pred_region
          %s1922 = sand.u32 %s210, 1
          %s1923 = scalar_lea.sflag [#allocation8], %s1922
          %s1924 = sand.u32 %s210, 1
          %s1925 = smul.addr %s1924, 128
          %s1926 = scalar_lea.vmem [#allocation12], %s1925
          %1928 = dma.done %s1923, 2048
        $region80: #{tpu_custom_call.1} parent=75 // pred_fallthru
          _
      $region76: #{tpu_custom_call.1} parent=5 // pred_fallthru
        _
    $region6: #{tpu_custom_call.1} parent=1 // loop_footer
      %s24 = sadd.s32 1, %s20
    $region7: #{tpu_custom_call.1} parent=1 // loop_footer_branch
      %19 = sbr.rel target = $region3
    $region8: #{tpu_custom_call.1} parent=1 // loop_exit
      _
    %1929 = vsyncpa [#allocation7], 1
    %s1930 = scalar_lea.sflag [#allocation7], 1
    %1931 = vsyncpa %s1930, 1
    %1932 = vsyncpa [#allocation10], 1
    %1933 = vsyncpa [#allocation8], 1
    %s1934 = scalar_lea.sflag [#allocation8], 1
    %1935 = vsyncpa %s1934, 1

</llo_original>
